<compile_context>
chip_gen: v7x
topology: tpu7x:2x2x1
jax: 0.10.0
libtpu: 0.0.40
codegen_flags: <defaults>
</compile_context>

<pallas_src>
import jax
import jax.numpy as jnp
from jax.experimental import pallas as pl
from jax.experimental.pallas import tpu as pltpu

_LANE = 128
_SUBLANE = 8
_TARGET_BLOCK_BYTES = 10 * 1024 * 1024   # in+out VMEM per pipeline buffer (~8+2 MiB)
_VMEM_LIMIT_BYTES = 48 * 1024 * 1024     # < physical VMEM on v5e/v6e (128 MiB) and v7x (64 MiB)


def _make_abs_pool_kernel(wk: int, wp: int, sub: int, n_sub: int):
    """Kernel for input blocks (TR, 2*wk) -> output blocks (TR, wp).

    Each input-block row holds two adjacent image rows of width wk = 2*wp,
    i.e. one complete strip of 2x2 pooling windows.  `sub` rows are processed
    per inner-loop step so every in-register value is only a few vregs.
    """

    def kernel(x_ref, o_ref):
        def body(s, carry):
            r0 = pl.multiple_of(s * sub, sub)
            strip = x_ref[pl.ds(r0, sub), :]            # (sub, 2*wk)
            top = strip[:, :wk]                         # image row 2*hp
            bot = strip[:, wk:]                         # image row 2*hp + 1
            vmx = jnp.maximum(top, bot)                 # vertical window max
            vmn = jnp.minimum(top, bot)                 # vertical window min
            # Horizontal pair-reduce + lane compaction via in-register reshape.
            hmx = jnp.max(vmx.reshape(sub, wp, 2), axis=-1)   # MaxPool2d(x)
            hmn = jnp.min(vmn.reshape(sub, wp, 2), axis=-1)   # -MaxPool2d(-x)
            # where(pos >= neg, pos, -neg) with pos = hmx, neg = -hmn:
            o_ref[pl.ds(r0, sub), :] = jnp.where(hmx >= -hmn, hmx, hmn)
            return carry

        jax.lax.fori_loop(0, n_sub, body, 0)

    return kernel


def abs_pool(x: jax.Array) -> jax.Array:
    """x: (N, C, H, W) -> (N, C, H//2, W//2), AbsPool over MaxPool2d(2, 2)."""
    # TODO(synk): only the MaxPool2d(kernel_size=2, stride=2) pooling_module is
    # implemented; other pooling modules passed to AbsPool are not covered.
    N, C, H, W = x.shape
    Hp, Wp = H // 2, W // 2
    assert Hp > 0 and Wp > 0, "spatial dims must be >= 2 for 2x2/stride-2 pooling"
    if H != 2 * Hp or W != 2 * Wp:
        # MaxPool2d(2, 2) floor-drops odd spatial tails.
        x = x[:, :, : 2 * Hp, : 2 * Wp]
    Wk = 2 * Wp                       # (possibly truncated) image-row width
    RT = N * C * Hp                   # number of 2-row pooling strips (= output rows)

    # Free view of the contiguous activation: one pooling strip per row.
    xv = x.reshape(RT, 2 * Wk)

    # ---- compute sub-chunk: ~8 input vregs so in-kernel slices / the
    # compaction reshape stay register-scale.
    lane_tiles_in = pl.cdiv(2 * Wk, _LANE)
    sub = max(_SUBLANE, (64 // lane_tiles_in) // _SUBLANE * _SUBLANE)

    # ---- DMA block: as many strips as fit the VMEM budget (lane-padded bytes).
    item = x.dtype.itemsize
    row_bytes = (lane_tiles_in + pl.cdiv(Wp, _LANE)) * _LANE * item
    tr_cap = max(sub, (_TARGET_BLOCK_BYTES // row_bytes) // sub * sub)

    if RT > tr_cap:
        g = pl.cdiv(RT, tr_cap)
        if g % 2:
            g += 1                    # even split -> balanced across v7x's 2 TCs
        TR = pl.cdiv(pl.cdiv(RT, g), sub) * sub
        G = pl.cdiv(RT, TR)           # re-derived; rarely odd after rounding (acceptable)
    elif RT >= 2 * sub:
        # Fits one block, but split in two so both v7x TensorCores get work.
        TR = pl.cdiv(pl.cdiv(RT, 2), sub) * sub
        G = pl.cdiv(RT, TR)           # == 2
    else:
        TR = pl.cdiv(RT, sub) * sub   # single (possibly ragged) block, no host-side pad
        G = 1

    n_out = RT * Wp
    cost = pl.CostEstimate(
        flops=9 * n_out,                           # 3 max + 3 min + neg + cmp + select
        transcendentals=0,
        bytes_accessed=(4 * n_out + n_out) * item,
    )

    out = pl.pallas_call(
        _make_abs_pool_kernel(Wk, Wp, sub, TR // sub),
        out_shape=jax.ShapeDtypeStruct((RT, Wp), x.dtype),
        grid=(G,),
        in_specs=[pl.BlockSpec((TR, 2 * Wk), lambda i: (i, 0))],
        out_specs=pl.BlockSpec((TR, Wp), lambda i: (i, 0)),
        compiler_params=pltpu.CompilerParams(
            dimension_semantics=("parallel",),     # megacore-shardable grid axis
            vmem_limit_bytes=_VMEM_LIMIT_BYTES,
        ),
        cost_estimate=cost,
    )(xv)

    return out.reshape(N, C, Hp, Wp)


def abs_pool_reference(x: jax.Array) -> jax.Array:
    """Pure-JAX reference mirroring the PyTorch forward exactly."""
    N, C, H, W = x.shape
    Hp, Wp = H // 2, W // 2
    xs = x[:, :, : 2 * Hp, : 2 * Wp].reshape(N, C, Hp, 2, Wp, 2)
    pos = jnp.max(xs, axis=(3, 5))           # MaxPool2d(2, 2)(x)
    neg = jnp.max(-xs, axis=(3, 5))          # MaxPool2d(2, 2)(-x)
    return jnp.where(pos >= neg, pos, -neg)


if __name__ == "__main__":
    key = jax.random.PRNGKey(0)
    k1, k2, k3 = jax.random.split(key, 3)

    # Primary small shape (module-consistent).
    x1 = jax.random.normal(k1, (2, 4, 16, 16), dtype=jnp.float32)
    y1 = jax.block_until_ready(abs_pool(x1))
    assert y1.shape == (2, 4, 8, 8), y1.shape
    assert jnp.allclose(y1, abs_pool_reference(x1), atol=1e-6, rtol=0), "mismatch (2,4,16,16)"

    # Odd spatial dims (floor-pool) + ragged single boundary block.
    x2 = jax.random.normal(k2, (2, 3, 21, 29), dtype=jnp.float32)
    y2 = jax.block_until_ready(abs_pool(x2))
    assert y2.shape == (2, 3, 10, 14), y2.shape
    assert jnp.allclose(y2, abs_pool_reference(x2), atol=1e-6, rtol=0), "mismatch (2,3,21,29)"

    # Multi-step grid (G == 2, both TCs fed) + in-kernel sub-chunk loop.
    x3 = jax.random.normal(k3, (1, 32, 128, 128), dtype=jnp.float32)
    y3 = jax.block_until_ready(abs_pool(x3))
    assert y3.shape == (1, 32, 64, 64), y3.shape
    assert jnp.allclose(y3, abs_pool_reference(x3), atol=1e-6, rtol=0), "mismatch (1,32,128,128)"

    print("KERNEL_OK")
</pallas_src>

<mosaic_0001>
module attributes {stable_mosaic.version = 11 : i64} {
  func.func @kernel(%arg0: i32, %arg1: memref<64x32xf32, #tpu.memory_space<vmem>>, %arg2: memref<64x8xf32, #tpu.memory_space<vmem>>) attributes {dimension_semantics = [#tpu.dimension_semantics<parallel>], iteration_bounds = array<i64: 1>, scalar_prefetch = 0 : i64, scratch_operands = 0 : i64, tpu.core_type = #tpu.core_type<tc>, window_params = [{transform_indices = @transform_0, window_bounds = array<i64: 64, 32>}, {transform_indices = @transform_1, window_bounds = array<i64: 64, 8>}]} {
    %c0_i32 = arith.constant 0 : i32
    %c64_i32 = arith.constant 64 : i32
    %0 = arith.muli %c0_i32, %c64_i32 : i32
    %1 = tpu.assume_multiple %0, 64 : i32
    %2 = arith.index_cast %1 : i32 to index
    %c0 = arith.constant 0 : index
    %3 = vector.load %arg1[%2, %c0] : memref<64x32xf32, #tpu.memory_space<vmem>>, vector<64x32xf32>
    %4 = vector.extract_strided_slice %3 {offsets = [0, 0], sizes = [64, 16], strides = [1, 1]} : vector<64x32xf32> to vector<64x16xf32>
    %5 = vector.extract_strided_slice %3 {offsets = [0, 16], sizes = [64, 16], strides = [1, 1]} : vector<64x32xf32> to vector<64x16xf32>
    %6 = arith.maximumf %4, %5 : vector<64x16xf32>
    %7 = arith.minimumf %4, %5 : vector<64x16xf32>
    %8 = vector.shape_cast %6 : vector<64x16xf32> to vector<64x8x2xf32>
    %cst = arith.constant dense<0xFF800000> : vector<64x8xf32>
    %9 = vector.multi_reduction <maximumf>, %8, %cst [2] : vector<64x8x2xf32> to vector<64x8xf32>
    %10 = vector.shape_cast %7 : vector<64x16xf32> to vector<64x8x2xf32>
    %cst_0 = arith.constant dense<0x7F800000> : vector<64x8xf32>
    %11 = vector.multi_reduction <minimumf>, %10, %cst_0 [2] : vector<64x8x2xf32> to vector<64x8xf32>
    %cst_1 = arith.constant 0.000000e+00 : f32
    %12 = vector.broadcast %cst_1 : f32 to vector<64x8xf32>
    %13 = arith.subf %12, %11 : vector<64x8xf32>
    %14 = arith.cmpf oge, %9, %13 : vector<64x8xf32>
    %15 = arith.select %14, %9, %11 : vector<64x8xi1>, vector<64x8xf32>
    %16 = arith.index_cast %1 : i32 to index
    %c0_2 = arith.constant 0 : index
    %17 = vector.load %arg2[%16, %c0_2] : memref<64x8xf32, #tpu.memory_space<vmem>>, vector<64x8xf32>
    tpu.vector_store %arg2[%16, %c0_2], %15 {strides = array<i32>} : memref<64x8xf32, #tpu.memory_space<vmem>>, vector<64x8xf32>,
    %c1_i32 = arith.constant 1 : i32
    return
  }
  func.func @transform_0(%arg0: i32) -> (i32, i32) {
    %c0_i32 = arith.constant 0 : i32
    %c0_i32_0 = arith.constant 0 : i32
    return %arg0, %c0_i32 : i32, i32
  }
  func.func @transform_1(%arg0: i32) -> (i32, i32) {
    %c0_i32 = arith.constant 0 : i32
    %c0_i32_0 = arith.constant 0 : i32
    return %arg0, %c0_i32 : i32, i32
  }
}

</mosaic_0001>

<llo_original>
// kernel: tpu_custom_call.1
$region0: #{tpu_custom_call.1}
  #allocation0 [shape = 'u32[]', space=smem, size = 0x4, offset = 0x4, fixed_abs, tag = 'smem constant byte address 0x4 - core index']
  #allocation1 [shape = 'u32[144,128]{1,0:T(1,128)}', space=vmem, size = 0x12000, scoped, tag = 'internal scratch']
  %s0 = inlined_call_operand.vmem [shape: f32[64,32], index: 0, kind: input, shape index: {}]
  %s1 = inlined_call_operand.vmem [shape: f32[64,8], index: 1, kind: output, shape index: {}]
  %s2 = sld [smem:[#allocation0]]
  $region14: #{tpu_custom_call.1} parent=0
    _
  %s4 = ssub.s32 1, %s2
  %s5 = scalar_select 0, %s4, %s2
  // Predicated region
  $region2: #{tpu_custom_call.1} parent=0 // pred_check
    _
  $region3: #{tpu_custom_call.1} parent=0 // pred_check_branch
    %7 = sbr.rel (0) target = $region5
  $region4: #{tpu_custom_call.1} parent=0 // pred_region
    _
  $region5: #{tpu_custom_call.1} parent=0 // pred_fallthru
    _
  %v8 = vld [vmem:[%s0] sm:$0xff]
  %v9 = vld [vmem:[%s0 + $0x8] sm:$0xff]
  %v10 = vld [vmem:[%s0 + $0x10] sm:$0xff]
  %v11 = vld [vmem:[%s0 + $0x18] sm:$0xff]
  %v12 = vld [vmem:[%s0 + $0x20] sm:$0xff]
  %v13 = vld [vmem:[%s0 + $0x28] sm:$0xff]
  %v14 = vld [vmem:[%s0 + $0x30] sm:$0xff]
  %v15 = vld [vmem:[%s0 + $0x38] sm:$0xff]
  %24 = vrot.lane.b32.xlu0 %v8, 112
  %v25 = vpop.permute.xlu0 %24
  %26 = vrot.lane.b32.xlu0 %v9, 112
  %v27 = vpop.permute.xlu0 %26
  %28 = vrot.lane.b32.xlu0 %v10, 112
  %v29 = vpop.permute.xlu0 %28
  %30 = vrot.lane.b32.xlu0 %v11, 112
  %v31 = vpop.permute.xlu0 %30
  %32 = vrot.lane.b32.xlu0 %v12, 112
  %v33 = vpop.permute.xlu0 %32
  %34 = vrot.lane.b32.xlu0 %v13, 112
  %v35 = vpop.permute.xlu0 %34
  %36 = vrot.lane.b32.xlu0 %v14, 112
  %v37 = vpop.permute.xlu0 %36
  %38 = vrot.lane.b32.xlu0 %v15, 112
  %v39 = vpop.permute.xlu0 %38
  %v48 = vmax.f32 %v8, %v25
  %v49 = vmax.f32 %v9, %v27
  %v50 = vmax.f32 %v10, %v29
  %v51 = vmax.f32 %v11, %v31
  %v52 = vmax.f32 %v12, %v33
  %v53 = vmax.f32 %v13, %v35
  %v54 = vmax.f32 %v14, %v37
  %v55 = vmax.f32 %v15, %v39
  %v56 = vmin.f32 %v8, %v25
  %v57 = vmin.f32 %v9, %v27
  %v58 = vmin.f32 %v10, %v29
  %v59 = vmin.f32 %v11, %v31
  %v60 = vmin.f32 %v12, %v33
  %v61 = vmin.f32 %v13, %v35
  %v62 = vmin.f32 %v14, %v37
  %v63 = vmin.f32 %v15, %v39
  %72 = vrot.lane.b32.xlu0 %v48, 126
  %v73 = vpop.permute.xlu0 %72
  %74 = vrot.lane.b32.xlu0 %v49, 126
  %v75 = vpop.permute.xlu0 %74
  %76 = vrot.lane.b32.xlu0 %v50, 126
  %v77 = vpop.permute.xlu0 %76
  %78 = vrot.lane.b32.xlu0 %v51, 126
  %v79 = vpop.permute.xlu0 %78
  %80 = vrot.lane.b32.xlu0 %v52, 126
  %v81 = vpop.permute.xlu0 %80
  %82 = vrot.lane.b32.xlu0 %v53, 126
  %v83 = vpop.permute.xlu0 %82
  %84 = vrot.lane.b32.xlu0 %v54, 126
  %v85 = vpop.permute.xlu0 %84
  %86 = vrot.lane.b32.xlu0 %v55, 126
  %v87 = vpop.permute.xlu0 %86
  %96 = vrot.lane.b32.xlu0 %v48, 124
  %v97 = vpop.permute.xlu0 %96
  %98 = vrot.lane.b32.xlu0 %v49, 124
  %v99 = vpop.permute.xlu0 %98
  %100 = vrot.lane.b32.xlu0 %v50, 124
  %v101 = vpop.permute.xlu0 %100
  %102 = vrot.lane.b32.xlu0 %v51, 124
  %v103 = vpop.permute.xlu0 %102
  %104 = vrot.lane.b32.xlu0 %v52, 124
  %v105 = vpop.permute.xlu0 %104
  %106 = vrot.lane.b32.xlu0 %v53, 124
  %v107 = vpop.permute.xlu0 %106
  %108 = vrot.lane.b32.xlu0 %v54, 124
  %v109 = vpop.permute.xlu0 %108
  %110 = vrot.lane.b32.xlu0 %v55, 124
  %v111 = vpop.permute.xlu0 %110
  %120 = vrot.lane.b32.xlu0 %v48, 122
  %v121 = vpop.permute.xlu0 %120
  %122 = vrot.lane.b32.xlu0 %v49, 122
  %v123 = vpop.permute.xlu0 %122
  %124 = vrot.lane.b32.xlu0 %v50, 122
  %v125 = vpop.permute.xlu0 %124
  %126 = vrot.lane.b32.xlu0 %v51, 122
  %v127 = vpop.permute.xlu0 %126
  %128 = vrot.lane.b32.xlu0 %v52, 122
  %v129 = vpop.permute.xlu0 %128
  %130 = vrot.lane.b32.xlu0 %v53, 122
  %v131 = vpop.permute.xlu0 %130
  %132 = vrot.lane.b32.xlu0 %v54, 122
  %v133 = vpop.permute.xlu0 %132
  %134 = vrot.lane.b32.xlu0 %v55, 122
  %v135 = vpop.permute.xlu0 %134
  %144 = vrot.lane.b32.xlu0 %v48, 120
  %v145 = vpop.permute.xlu0 %144
  %146 = vrot.lane.b32.xlu0 %v49, 120
  %v147 = vpop.permute.xlu0 %146
  %148 = vrot.lane.b32.xlu0 %v50, 120
  %v149 = vpop.permute.xlu0 %148
  %150 = vrot.lane.b32.xlu0 %v51, 120
  %v151 = vpop.permute.xlu0 %150
  %152 = vrot.lane.b32.xlu0 %v52, 120
  %v153 = vpop.permute.xlu0 %152
  %154 = vrot.lane.b32.xlu0 %v53, 120
  %v155 = vpop.permute.xlu0 %154
  %156 = vrot.lane.b32.xlu0 %v54, 120
  %v157 = vpop.permute.xlu0 %156
  %158 = vrot.lane.b32.xlu0 %v55, 120
  %v159 = vpop.permute.xlu0 %158
  %168 = vrot.lane.b32.xlu0 %v48, 118
  %v169 = vpop.permute.xlu0 %168
  %170 = vrot.lane.b32.xlu0 %v49, 118
  %v171 = vpop.permute.xlu0 %170
  %172 = vrot.lane.b32.xlu0 %v50, 118
  %v173 = vpop.permute.xlu0 %172
  %174 = vrot.lane.b32.xlu0 %v51, 118
  %v175 = vpop.permute.xlu0 %174
  %176 = vrot.lane.b32.xlu0 %v52, 118
  %v177 = vpop.permute.xlu0 %176
  %178 = vrot.lane.b32.xlu0 %v53, 118
  %v179 = vpop.permute.xlu0 %178
  %180 = vrot.lane.b32.xlu0 %v54, 118
  %v181 = vpop.permute.xlu0 %180
  %182 = vrot.lane.b32.xlu0 %v55, 118
  %v183 = vpop.permute.xlu0 %182
  %192 = vrot.lane.b32.xlu0 %v48, 116
  %v193 = vpop.permute.xlu0 %192
  %194 = vrot.lane.b32.xlu0 %v49, 116
  %v195 = vpop.permute.xlu0 %194
  %196 = vrot.lane.b32.xlu0 %v50, 116
  %v197 = vpop.permute.xlu0 %196
  %198 = vrot.lane.b32.xlu0 %v51, 116
  %v199 = vpop.permute.xlu0 %198
  %200 = vrot.lane.b32.xlu0 %v52, 116
  %v201 = vpop.permute.xlu0 %200
  %202 = vrot.lane.b32.xlu0 %v53, 116
  %v203 = vpop.permute.xlu0 %202
  %204 = vrot.lane.b32.xlu0 %v54, 116
  %v205 = vpop.permute.xlu0 %204
  %206 = vrot.lane.b32.xlu0 %v55, 116
  %v207 = vpop.permute.xlu0 %206
  %216 = vrot.lane.b32.xlu0 %v48, 114
  %v217 = vpop.permute.xlu0 %216
  %218 = vrot.lane.b32.xlu0 %v49, 114
  %v219 = vpop.permute.xlu0 %218
  %220 = vrot.lane.b32.xlu0 %v50, 114
  %v221 = vpop.permute.xlu0 %220
  %222 = vrot.lane.b32.xlu0 %v51, 114
  %v223 = vpop.permute.xlu0 %222
  %224 = vrot.lane.b32.xlu0 %v52, 114
  %v225 = vpop.permute.xlu0 %224
  %226 = vrot.lane.b32.xlu0 %v53, 114
  %v227 = vpop.permute.xlu0 %226
  %228 = vrot.lane.b32.xlu0 %v54, 114
  %v229 = vpop.permute.xlu0 %228
  %230 = vrot.lane.b32.xlu0 %v55, 114
  %v231 = vpop.permute.xlu0 %230
  %v240 = vcombine.low %v48, %v97
  %v241 = vcombine.high %v48, %v97
  %v243 = vunpack.c.l.s4 1983009808
  %v244 = vunpack.c.0.s8 %v243
  %v245 = vlaneseq
  %v246 = vshrl.u32 %v245, 7
  %v247 = vsub.s32 %v244, %v246
  %v248 = vrot.slane %v240, %v247
  %v250 = vunpack.c.l.s4 1983009808
  %v251 = vunpack.c.0.s8 %v250
  %v252 = vlaneseq
  %v253 = vshrl.u32 %v252, 7
  %v254 = vsub.s32 %v251, %v253
  %v255 = vrot.slane %v241, %v254
  %v256 = vcombine.low %v73, %v121
  %v257 = vcombine.high %v73, %v121
  %v259 = vunpack.c.l.s4 1983009808
  %v260 = vunpack.c.0.s8 %v259
  %v261 = vlaneseq
  %v262 = vshrl.u32 %v261, 7
  %v263 = vsub.s32 %v260, %v262
  %v264 = vrot.slane %v256, %v263
  %v266 = vunpack.c.l.s4 1983009808
  %v267 = vunpack.c.0.s8 %v266
  %v268 = vlaneseq
  %v269 = vshrl.u32 %v268, 7
  %v270 = vsub.s32 %v267, %v269
  %v271 = vrot.slane %v257, %v270
  %v272 = vcombine.low %v145, %v193
  %v273 = vcombine.high %v145, %v193
  %v275 = vunpack.c.l.s4 1983009808
  %v276 = vunpack.c.0.s8 %v275
  %v277 = vlaneseq
  %v278 = vshrl.u32 %v277, 7
  %v279 = vsub.s32 %v276, %v278
  %v280 = vrot.slane %v272, %v279
  %v282 = vunpack.c.l.s4 1983009808
  %v283 = vunpack.c.0.s8 %v282
  %v284 = vlaneseq
  %v285 = vshrl.u32 %v284, 7
  %v286 = vsub.s32 %v283, %v285
  %v287 = vrot.slane %v273, %v286
  %v288 = vcombine.low %v169, %v217
  %v289 = vcombine.high %v169, %v217
  %v291 = vunpack.c.l.s4 1983009808
  %v292 = vunpack.c.0.s8 %v291
  %v293 = vlaneseq
  %v294 = vshrl.u32 %v293, 7
  %v295 = vsub.s32 %v292, %v294
  %v296 = vrot.slane %v288, %v295
  %v298 = vunpack.c.l.s4 1983009808
  %v299 = vunpack.c.0.s8 %v298
  %v300 = vlaneseq
  %v301 = vshrl.u32 %v300, 7
  %v302 = vsub.s32 %v299, %v301
  %v303 = vrot.slane %v289, %v302
  %v304 = vcombine.low %v248, %v264
  %v305 = vcombine.high %v248, %v264
  %v307 = vunpack.c.l.s4 1934713408
  %v308 = vunpack.c.0.s8 %v307
  %v309 = vlaneseq
  %v310 = vshrl.u32 %v309, 7
  %v311 = vsub.s32 %v308, %v310
  %v312 = vrot.slane %v304, %v311
  %v314 = vunpack.c.l.s4 1934713408
  %v315 = vunpack.c.0.s8 %v314
  %v316 = vlaneseq
  %v317 = vshrl.u32 %v316, 7
  %v318 = vsub.s32 %v315, %v317
  %v319 = vrot.slane %v305, %v318
  %v320 = vcombine.low %v255, %v271
  %v321 = vcombine.high %v255, %v271
  %v323 = vunpack.c.l.s4 1934713408
  %v324 = vunpack.c.0.s8 %v323
  %v325 = vlaneseq
  %v326 = vshrl.u32 %v325, 7
  %v327 = vsub.s32 %v324, %v326
  %v328 = vrot.slane %v320, %v327
  %v330 = vunpack.c.l.s4 1934713408
  %v331 = vunpack.c.0.s8 %v330
  %v332 = vlaneseq
  %v333 = vshrl.u32 %v332, 7
  %v334 = vsub.s32 %v331, %v333
  %v335 = vrot.slane %v321, %v334
  %v336 = vcombine.low %v280, %v296
  %v337 = vcombine.high %v280, %v296
  %v339 = vunpack.c.l.s4 1934713408
  %v340 = vunpack.c.0.s8 %v339
  %v341 = vlaneseq
  %v342 = vshrl.u32 %v341, 7
  %v343 = vsub.s32 %v340, %v342
  %v344 = vrot.slane %v336, %v343
  %v346 = vunpack.c.l.s4 1934713408
  %v347 = vunpack.c.0.s8 %v346
  %v348 = vlaneseq
  %v349 = vshrl.u32 %v348, 7
  %v350 = vsub.s32 %v347, %v349
  %v351 = vrot.slane %v337, %v350
  %v352 = vcombine.low %v287, %v303
  %v353 = vcombine.high %v287, %v303
  %v355 = vunpack.c.l.s4 1934713408
  %v356 = vunpack.c.0.s8 %v355
  %v357 = vlaneseq
  %v358 = vshrl.u32 %v357, 7
  %v359 = vsub.s32 %v356, %v358
  %v360 = vrot.slane %v352, %v359
  %v362 = vunpack.c.l.s4 1934713408
  %v363 = vunpack.c.0.s8 %v362
  %v364 = vlaneseq
  %v365 = vshrl.u32 %v364, 7
  %v366 = vsub.s32 %v363, %v365
  %v367 = vrot.slane %v353, %v366
  %v368 = vcombine.low %v312, %v344
  %v369 = vcombine.high %v312, %v344
  %v370 = vcombine.low %v319, %v351
  %v371 = vcombine.high %v319, %v351
  %v372 = vcombine.low %v328, %v360
  %v373 = vcombine.high %v328, %v360
  %v374 = vcombine.low %v335, %v367
  %v375 = vcombine.high %v335, %v367
  %v376 = vcombine.low %v49, %v99
  %v377 = vcombine.high %v49, %v99
  %v379 = vunpack.c.l.s4 1983009808
  %v380 = vunpack.c.0.s8 %v379
  %v381 = vlaneseq
  %v382 = vshrl.u32 %v381, 7
  %v383 = vsub.s32 %v380, %v382
  %v384 = vrot.slane %v376, %v383
  %v386 = vunpack.c.l.s4 1983009808
  %v387 = vunpack.c.0.s8 %v386
  %v388 = vlaneseq
  %v389 = vshrl.u32 %v388, 7
  %v390 = vsub.s32 %v387, %v389
  %v391 = vrot.slane %v377, %v390
  %v392 = vcombine.low %v75, %v123
  %v393 = vcombine.high %v75, %v123
  %v395 = vunpack.c.l.s4 1983009808
  %v396 = vunpack.c.0.s8 %v395
  %v397 = vlaneseq
  %v398 = vshrl.u32 %v397, 7
  %v399 = vsub.s32 %v396, %v398
  %v400 = vrot.slane %v392, %v399
  %v402 = vunpack.c.l.s4 1983009808
  %v403 = vunpack.c.0.s8 %v402
  %v404 = vlaneseq
  %v405 = vshrl.u32 %v404, 7
  %v406 = vsub.s32 %v403, %v405
  %v407 = vrot.slane %v393, %v406
  %v408 = vcombine.low %v147, %v195
  %v409 = vcombine.high %v147, %v195
  %v411 = vunpack.c.l.s4 1983009808
  %v412 = vunpack.c.0.s8 %v411
  %v413 = vlaneseq
  %v414 = vshrl.u32 %v413, 7
  %v415 = vsub.s32 %v412, %v414
  %v416 = vrot.slane %v408, %v415
  %v418 = vunpack.c.l.s4 1983009808
  %v419 = vunpack.c.0.s8 %v418
  %v420 = vlaneseq
  %v421 = vshrl.u32 %v420, 7
  %v422 = vsub.s32 %v419, %v421
  %v423 = vrot.slane %v409, %v422
  %v424 = vcombine.low %v171, %v219
  %v425 = vcombine.high %v171, %v219
  %v427 = vunpack.c.l.s4 1983009808
  %v428 = vunpack.c.0.s8 %v427
  %v429 = vlaneseq
  %v430 = vshrl.u32 %v429, 7
  %v431 = vsub.s32 %v428, %v430
  %v432 = vrot.slane %v424, %v431
  %v434 = vunpack.c.l.s4 1983009808
  %v435 = vunpack.c.0.s8 %v434
  %v436 = vlaneseq
  %v437 = vshrl.u32 %v436, 7
  %v438 = vsub.s32 %v435, %v437
  %v439 = vrot.slane %v425, %v438
  %v440 = vcombine.low %v384, %v400
  %v441 = vcombine.high %v384, %v400
  %v443 = vunpack.c.l.s4 1934713408
  %v444 = vunpack.c.0.s8 %v443
  %v445 = vlaneseq
  %v446 = vshrl.u32 %v445, 7
  %v447 = vsub.s32 %v444, %v446
  %v448 = vrot.slane %v440, %v447
  %v450 = vunpack.c.l.s4 1934713408
  %v451 = vunpack.c.0.s8 %v450
  %v452 = vlaneseq
  %v453 = vshrl.u32 %v452, 7
  %v454 = vsub.s32 %v451, %v453
  %v455 = vrot.slane %v441, %v454
  %v456 = vcombine.low %v391, %v407
  %v457 = vcombine.high %v391, %v407
  %v459 = vunpack.c.l.s4 1934713408
  %v460 = vunpack.c.0.s8 %v459
  %v461 = vlaneseq
  %v462 = vshrl.u32 %v461, 7
  %v463 = vsub.s32 %v460, %v462
  %v464 = vrot.slane %v456, %v463
  %v466 = vunpack.c.l.s4 1934713408
  %v467 = vunpack.c.0.s8 %v466
  %v468 = vlaneseq
  %v469 = vshrl.u32 %v468, 7
  %v470 = vsub.s32 %v467, %v469
  %v471 = vrot.slane %v457, %v470
  %v472 = vcombine.low %v416, %v432
  %v473 = vcombine.high %v416, %v432
  %v475 = vunpack.c.l.s4 1934713408
  %v476 = vunpack.c.0.s8 %v475
  %v477 = vlaneseq
  %v478 = vshrl.u32 %v477, 7
  %v479 = vsub.s32 %v476, %v478
  %v480 = vrot.slane %v472, %v479
  %v482 = vunpack.c.l.s4 1934713408
  %v483 = vunpack.c.0.s8 %v482
  %v484 = vlaneseq
  %v485 = vshrl.u32 %v484, 7
  %v486 = vsub.s32 %v483, %v485
  %v487 = vrot.slane %v473, %v486
  %v488 = vcombine.low %v423, %v439
  %v489 = vcombine.high %v423, %v439
  %v491 = vunpack.c.l.s4 1934713408
  %v492 = vunpack.c.0.s8 %v491
  %v493 = vlaneseq
  %v494 = vshrl.u32 %v493, 7
  %v495 = vsub.s32 %v492, %v494
  %v496 = vrot.slane %v488, %v495
  %v498 = vunpack.c.l.s4 1934713408
  %v499 = vunpack.c.0.s8 %v498
  %v500 = vlaneseq
  %v501 = vshrl.u32 %v500, 7
  %v502 = vsub.s32 %v499, %v501
  %v503 = vrot.slane %v489, %v502
  %v504 = vcombine.low %v448, %v480
  %v505 = vcombine.high %v448, %v480
  %v506 = vcombine.low %v455, %v487
  %v507 = vcombine.high %v455, %v487
  %v508 = vcombine.low %v464, %v496
  %v509 = vcombine.high %v464, %v496
  %v510 = vcombine.low %v471, %v503
  %v511 = vcombine.high %v471, %v503
  %v512 = vcombine.low %v50, %v101
  %v513 = vcombine.high %v50, %v101
  %v515 = vunpack.c.l.s4 1983009808
  %v516 = vunpack.c.0.s8 %v515
  %v517 = vlaneseq
  %v518 = vshrl.u32 %v517, 7
  %v519 = vsub.s32 %v516, %v518
  %v520 = vrot.slane %v512, %v519
  %v522 = vunpack.c.l.s4 1983009808
  %v523 = vunpack.c.0.s8 %v522
  %v524 = vlaneseq
  %v525 = vshrl.u32 %v524, 7
  %v526 = vsub.s32 %v523, %v525
  %v527 = vrot.slane %v513, %v526
  %v528 = vcombine.low %v77, %v125
  %v529 = vcombine.high %v77, %v125
  %v531 = vunpack.c.l.s4 1983009808
  %v532 = vunpack.c.0.s8 %v531
  %v533 = vlaneseq
  %v534 = vshrl.u32 %v533, 7
  %v535 = vsub.s32 %v532, %v534
  %v536 = vrot.slane %v528, %v535
  %v538 = vunpack.c.l.s4 1983009808
  %v539 = vunpack.c.0.s8 %v538
  %v540 = vlaneseq
  %v541 = vshrl.u32 %v540, 7
  %v542 = vsub.s32 %v539, %v541
  %v543 = vrot.slane %v529, %v542
  %v544 = vcombine.low %v149, %v197
  %v545 = vcombine.high %v149, %v197
  %v547 = vunpack.c.l.s4 1983009808
  %v548 = vunpack.c.0.s8 %v547
  %v549 = vlaneseq
  %v550 = vshrl.u32 %v549, 7
  %v551 = vsub.s32 %v548, %v550
  %v552 = vrot.slane %v544, %v551
  %v554 = vunpack.c.l.s4 1983009808
  %v555 = vunpack.c.0.s8 %v554
  %v556 = vlaneseq
  %v557 = vshrl.u32 %v556, 7
  %v558 = vsub.s32 %v555, %v557
  %v559 = vrot.slane %v545, %v558
  %v560 = vcombine.low %v173, %v221
  %v561 = vcombine.high %v173, %v221
  %v563 = vunpack.c.l.s4 1983009808
  %v564 = vunpack.c.0.s8 %v563
  %v565 = vlaneseq
  %v566 = vshrl.u32 %v565, 7
  %v567 = vsub.s32 %v564, %v566
  %v568 = vrot.slane %v560, %v567
  %v570 = vunpack.c.l.s4 1983009808
  %v571 = vunpack.c.0.s8 %v570
  %v572 = vlaneseq
  %v573 = vshrl.u32 %v572, 7
  %v574 = vsub.s32 %v571, %v573
  %v575 = vrot.slane %v561, %v574
  %v576 = vcombine.low %v520, %v536
  %v577 = vcombine.high %v520, %v536
  %v579 = vunpack.c.l.s4 1934713408
  %v580 = vunpack.c.0.s8 %v579
  %v581 = vlaneseq
  %v582 = vshrl.u32 %v581, 7
  %v583 = vsub.s32 %v580, %v582
  %v584 = vrot.slane %v576, %v583
  %v586 = vunpack.c.l.s4 1934713408
  %v587 = vunpack.c.0.s8 %v586
  %v588 = vlaneseq
  %v589 = vshrl.u32 %v588, 7
  %v590 = vsub.s32 %v587, %v589
  %v591 = vrot.slane %v577, %v590
  %v592 = vcombine.low %v527, %v543
  %v593 = vcombine.high %v527, %v543
  %v595 = vunpack.c.l.s4 1934713408
  %v596 = vunpack.c.0.s8 %v595
  %v597 = vlaneseq
  %v598 = vshrl.u32 %v597, 7
  %v599 = vsub.s32 %v596, %v598
  %v600 = vrot.slane %v592, %v599
  %v602 = vunpack.c.l.s4 1934713408
  %v603 = vunpack.c.0.s8 %v602
  %v604 = vlaneseq
  %v605 = vshrl.u32 %v604, 7
  %v606 = vsub.s32 %v603, %v605
  %v607 = vrot.slane %v593, %v606
  %v608 = vcombine.low %v552, %v568
  %v609 = vcombine.high %v552, %v568
  %v611 = vunpack.c.l.s4 1934713408
  %v612 = vunpack.c.0.s8 %v611
  %v613 = vlaneseq
  %v614 = vshrl.u32 %v613, 7
  %v615 = vsub.s32 %v612, %v614
  %v616 = vrot.slane %v608, %v615
  %v618 = vunpack.c.l.s4 1934713408
  %v619 = vunpack.c.0.s8 %v618
  %v620 = vlaneseq
  %v621 = vshrl.u32 %v620, 7
  %v622 = vsub.s32 %v619, %v621
  %v623 = vrot.slane %v609, %v622
  %v624 = vcombine.low %v559, %v575
  %v625 = vcombine.high %v559, %v575
  %v627 = vunpack.c.l.s4 1934713408
  %v628 = vunpack.c.0.s8 %v627
  %v629 = vlaneseq
  %v630 = vshrl.u32 %v629, 7
  %v631 = vsub.s32 %v628, %v630
  %v632 = vrot.slane %v624, %v631
  %v634 = vunpack.c.l.s4 1934713408
  %v635 = vunpack.c.0.s8 %v634
  %v636 = vlaneseq
  %v637 = vshrl.u32 %v636, 7
  %v638 = vsub.s32 %v635, %v637
  %v639 = vrot.slane %v625, %v638
  %v640 = vcombine.low %v584, %v616
  %v641 = vcombine.high %v584, %v616
  %v642 = vcombine.low %v591, %v623
  %v643 = vcombine.high %v591, %v623
  %v644 = vcombine.low %v600, %v632
  %v645 = vcombine.high %v600, %v632
  %v646 = vcombine.low %v607, %v639
  %v647 = vcombine.high %v607, %v639
  %v648 = vcombine.low %v51, %v103
  %v649 = vcombine.high %v51, %v103
  %v651 = vunpack.c.l.s4 1983009808
  %v652 = vunpack.c.0.s8 %v651
  %v653 = vlaneseq
  %v654 = vshrl.u32 %v653, 7
  %v655 = vsub.s32 %v652, %v654
  %v656 = vrot.slane %v648, %v655
  %v658 = vunpack.c.l.s4 1983009808
  %v659 = vunpack.c.0.s8 %v658
  %v660 = vlaneseq
  %v661 = vshrl.u32 %v660, 7
  %v662 = vsub.s32 %v659, %v661
  %v663 = vrot.slane %v649, %v662
  %v664 = vcombine.low %v79, %v127
  %v665 = vcombine.high %v79, %v127
  %v667 = vunpack.c.l.s4 1983009808
  %v668 = vunpack.c.0.s8 %v667
  %v669 = vlaneseq
  %v670 = vshrl.u32 %v669, 7
  %v671 = vsub.s32 %v668, %v670
  %v672 = vrot.slane %v664, %v671
  %v674 = vunpack.c.l.s4 1983009808
  %v675 = vunpack.c.0.s8 %v674
  %v676 = vlaneseq
  %v677 = vshrl.u32 %v676, 7
  %v678 = vsub.s32 %v675, %v677
  %v679 = vrot.slane %v665, %v678
  %v680 = vcombine.low %v151, %v199
  %v681 = vcombine.high %v151, %v199
  %v683 = vunpack.c.l.s4 1983009808
  %v684 = vunpack.c.0.s8 %v683
  %v685 = vlaneseq
  %v686 = vshrl.u32 %v685, 7
  %v687 = vsub.s32 %v684, %v686
  %v688 = vrot.slane %v680, %v687
  %v690 = vunpack.c.l.s4 1983009808
  %v691 = vunpack.c.0.s8 %v690
  %v692 = vlaneseq
  %v693 = vshrl.u32 %v692, 7
  %v694 = vsub.s32 %v691, %v693
  %v695 = vrot.slane %v681, %v694
  %v696 = vcombine.low %v175, %v223
  %v697 = vcombine.high %v175, %v223
  %v699 = vunpack.c.l.s4 1983009808
  %v700 = vunpack.c.0.s8 %v699
  %v701 = vlaneseq
  %v702 = vshrl.u32 %v701, 7
  %v703 = vsub.s32 %v700, %v702
  %v704 = vrot.slane %v696, %v703
  %v706 = vunpack.c.l.s4 1983009808
  %v707 = vunpack.c.0.s8 %v706
  %v708 = vlaneseq
  %v709 = vshrl.u32 %v708, 7
  %v710 = vsub.s32 %v707, %v709
  %v711 = vrot.slane %v697, %v710
  %v712 = vcombine.low %v656, %v672
  %v713 = vcombine.high %v656, %v672
  %v715 = vunpack.c.l.s4 1934713408
  %v716 = vunpack.c.0.s8 %v715
  %v717 = vlaneseq
  %v718 = vshrl.u32 %v717, 7
  %v719 = vsub.s32 %v716, %v718
  %v720 = vrot.slane %v712, %v719
  %v722 = vunpack.c.l.s4 1934713408
  %v723 = vunpack.c.0.s8 %v722
  %v724 = vlaneseq
  %v725 = vshrl.u32 %v724, 7
  %v726 = vsub.s32 %v723, %v725
  %v727 = vrot.slane %v713, %v726
  %v728 = vcombine.low %v663, %v679
  %v729 = vcombine.high %v663, %v679
  %v731 = vunpack.c.l.s4 1934713408
  %v732 = vunpack.c.0.s8 %v731
  %v733 = vlaneseq
  %v734 = vshrl.u32 %v733, 7
  %v735 = vsub.s32 %v732, %v734
  %v736 = vrot.slane %v728, %v735
  %v738 = vunpack.c.l.s4 1934713408
  %v739 = vunpack.c.0.s8 %v738
  %v740 = vlaneseq
  %v741 = vshrl.u32 %v740, 7
  %v742 = vsub.s32 %v739, %v741
  %v743 = vrot.slane %v729, %v742
  %v744 = vcombine.low %v688, %v704
  %v745 = vcombine.high %v688, %v704
  %v747 = vunpack.c.l.s4 1934713408
  %v748 = vunpack.c.0.s8 %v747
  %v749 = vlaneseq
  %v750 = vshrl.u32 %v749, 7
  %v751 = vsub.s32 %v748, %v750
  %v752 = vrot.slane %v744, %v751
  %v754 = vunpack.c.l.s4 1934713408
  %v755 = vunpack.c.0.s8 %v754
  %v756 = vlaneseq
  %v757 = vshrl.u32 %v756, 7
  %v758 = vsub.s32 %v755, %v757
  %v759 = vrot.slane %v745, %v758
  %v760 = vcombine.low %v695, %v711
  %v761 = vcombine.high %v695, %v711
  %v763 = vunpack.c.l.s4 1934713408
  %v764 = vunpack.c.0.s8 %v763
  %v765 = vlaneseq
  %v766 = vshrl.u32 %v765, 7
  %v767 = vsub.s32 %v764, %v766
  %v768 = vrot.slane %v760, %v767
  %v770 = vunpack.c.l.s4 1934713408
  %v771 = vunpack.c.0.s8 %v770
  %v772 = vlaneseq
  %v773 = vshrl.u32 %v772, 7
  %v774 = vsub.s32 %v771, %v773
  %v775 = vrot.slane %v761, %v774
  %v776 = vcombine.low %v720, %v752
  %v777 = vcombine.high %v720, %v752
  %v778 = vcombine.low %v727, %v759
  %v779 = vcombine.high %v727, %v759
  %v780 = vcombine.low %v736, %v768
  %v781 = vcombine.high %v736, %v768
  %v782 = vcombine.low %v743, %v775
  %v783 = vcombine.high %v743, %v775
  %v784 = vcombine.low %v52, %v105
  %v785 = vcombine.high %v52, %v105
  %v787 = vunpack.c.l.s4 1983009808
  %v788 = vunpack.c.0.s8 %v787
  %v789 = vlaneseq
  %v790 = vshrl.u32 %v789, 7
  %v791 = vsub.s32 %v788, %v790
  %v792 = vrot.slane %v784, %v791
  %v794 = vunpack.c.l.s4 1983009808
  %v795 = vunpack.c.0.s8 %v794
  %v796 = vlaneseq
  %v797 = vshrl.u32 %v796, 7
  %v798 = vsub.s32 %v795, %v797
  %v799 = vrot.slane %v785, %v798
  %v800 = vcombine.low %v81, %v129
  %v801 = vcombine.high %v81, %v129
  %v803 = vunpack.c.l.s4 1983009808
  %v804 = vunpack.c.0.s8 %v803
  %v805 = vlaneseq
  %v806 = vshrl.u32 %v805, 7
  %v807 = vsub.s32 %v804, %v806
  %v808 = vrot.slane %v800, %v807
  %v810 = vunpack.c.l.s4 1983009808
  %v811 = vunpack.c.0.s8 %v810
  %v812 = vlaneseq
  %v813 = vshrl.u32 %v812, 7
  %v814 = vsub.s32 %v811, %v813
  %v815 = vrot.slane %v801, %v814
  %v816 = vcombine.low %v153, %v201
  %v817 = vcombine.high %v153, %v201
  %v819 = vunpack.c.l.s4 1983009808
  %v820 = vunpack.c.0.s8 %v819
  %v821 = vlaneseq
  %v822 = vshrl.u32 %v821, 7
  %v823 = vsub.s32 %v820, %v822
  %v824 = vrot.slane %v816, %v823
  %v826 = vunpack.c.l.s4 1983009808
  %v827 = vunpack.c.0.s8 %v826
  %v828 = vlaneseq
  %v829 = vshrl.u32 %v828, 7
  %v830 = vsub.s32 %v827, %v829
  %v831 = vrot.slane %v817, %v830
  %v832 = vcombine.low %v177, %v225
  %v833 = vcombine.high %v177, %v225
  %v835 = vunpack.c.l.s4 1983009808
  %v836 = vunpack.c.0.s8 %v835
  %v837 = vlaneseq
  %v838 = vshrl.u32 %v837, 7
  %v839 = vsub.s32 %v836, %v838
  %v840 = vrot.slane %v832, %v839
  %v842 = vunpack.c.l.s4 1983009808
  %v843 = vunpack.c.0.s8 %v842
  %v844 = vlaneseq
  %v845 = vshrl.u32 %v844, 7
  %v846 = vsub.s32 %v843, %v845
  %v847 = vrot.slane %v833, %v846
  %v848 = vcombine.low %v792, %v808
  %v849 = vcombine.high %v792, %v808
  %v851 = vunpack.c.l.s4 1934713408
  %v852 = vunpack.c.0.s8 %v851
  %v853 = vlaneseq
  %v854 = vshrl.u32 %v853, 7
  %v855 = vsub.s32 %v852, %v854
  %v856 = vrot.slane %v848, %v855
  %v858 = vunpack.c.l.s4 1934713408
  %v859 = vunpack.c.0.s8 %v858
  %v860 = vlaneseq
  %v861 = vshrl.u32 %v860, 7
  %v862 = vsub.s32 %v859, %v861
  %v863 = vrot.slane %v849, %v862
  %v864 = vcombine.low %v799, %v815
  %v865 = vcombine.high %v799, %v815
  %v867 = vunpack.c.l.s4 1934713408
  %v868 = vunpack.c.0.s8 %v867
  %v869 = vlaneseq
  %v870 = vshrl.u32 %v869, 7
  %v871 = vsub.s32 %v868, %v870
  %v872 = vrot.slane %v864, %v871
  %v874 = vunpack.c.l.s4 1934713408
  %v875 = vunpack.c.0.s8 %v874
  %v876 = vlaneseq
  %v877 = vshrl.u32 %v876, 7
  %v878 = vsub.s32 %v875, %v877
  %v879 = vrot.slane %v865, %v878
  %v880 = vcombine.low %v824, %v840
  %v881 = vcombine.high %v824, %v840
  %v883 = vunpack.c.l.s4 1934713408
  %v884 = vunpack.c.0.s8 %v883
  %v885 = vlaneseq
  %v886 = vshrl.u32 %v885, 7
  %v887 = vsub.s32 %v884, %v886
  %v888 = vrot.slane %v880, %v887
  %v890 = vunpack.c.l.s4 1934713408
  %v891 = vunpack.c.0.s8 %v890
  %v892 = vlaneseq
  %v893 = vshrl.u32 %v892, 7
  %v894 = vsub.s32 %v891, %v893
  %v895 = vrot.slane %v881, %v894
  %v896 = vcombine.low %v831, %v847
  %v897 = vcombine.high %v831, %v847
  %v899 = vunpack.c.l.s4 1934713408
  %v900 = vunpack.c.0.s8 %v899
  %v901 = vlaneseq
  %v902 = vshrl.u32 %v901, 7
  %v903 = vsub.s32 %v900, %v902
  %v904 = vrot.slane %v896, %v903
  %v906 = vunpack.c.l.s4 1934713408
  %v907 = vunpack.c.0.s8 %v906
  %v908 = vlaneseq
  %v909 = vshrl.u32 %v908, 7
  %v910 = vsub.s32 %v907, %v909
  %v911 = vrot.slane %v897, %v910
  %v912 = vcombine.low %v856, %v888
  %v913 = vcombine.high %v856, %v888
  %v914 = vcombine.low %v863, %v895
  %v915 = vcombine.high %v863, %v895
  %v916 = vcombine.low %v872, %v904
  %v917 = vcombine.high %v872, %v904
  %v918 = vcombine.low %v879, %v911
  %v919 = vcombine.high %v879, %v911
  %v920 = vcombine.low %v53, %v107
  %v921 = vcombine.high %v53, %v107
  %v923 = vunpack.c.l.s4 1983009808
  %v924 = vunpack.c.0.s8 %v923
  %v925 = vlaneseq
  %v926 = vshrl.u32 %v925, 7
  %v927 = vsub.s32 %v924, %v926
  %v928 = vrot.slane %v920, %v927
  %v930 = vunpack.c.l.s4 1983009808
  %v931 = vunpack.c.0.s8 %v930
  %v932 = vlaneseq
  %v933 = vshrl.u32 %v932, 7
  %v934 = vsub.s32 %v931, %v933
  %v935 = vrot.slane %v921, %v934
  %v936 = vcombine.low %v83, %v131
  %v937 = vcombine.high %v83, %v131
  %v939 = vunpack.c.l.s4 1983009808
  %v940 = vunpack.c.0.s8 %v939
  %v941 = vlaneseq
  %v942 = vshrl.u32 %v941, 7
  %v943 = vsub.s32 %v940, %v942
  %v944 = vrot.slane %v936, %v943
  %v946 = vunpack.c.l.s4 1983009808
  %v947 = vunpack.c.0.s8 %v946
  %v948 = vlaneseq
  %v949 = vshrl.u32 %v948, 7
  %v950 = vsub.s32 %v947, %v949
  %v951 = vrot.slane %v937, %v950
  %v952 = vcombine.low %v155, %v203
  %v953 = vcombine.high %v155, %v203
  %v955 = vunpack.c.l.s4 1983009808
  %v956 = vunpack.c.0.s8 %v955
  %v957 = vlaneseq
  %v958 = vshrl.u32 %v957, 7
  %v959 = vsub.s32 %v956, %v958
  %v960 = vrot.slane %v952, %v959
  %v962 = vunpack.c.l.s4 1983009808
  %v963 = vunpack.c.0.s8 %v962
  %v964 = vlaneseq
  %v965 = vshrl.u32 %v964, 7
  %v966 = vsub.s32 %v963, %v965
  %v967 = vrot.slane %v953, %v966
  %v968 = vcombine.low %v179, %v227
  %v969 = vcombine.high %v179, %v227
  %v971 = vunpack.c.l.s4 1983009808
  %v972 = vunpack.c.0.s8 %v971
  %v973 = vlaneseq
  %v974 = vshrl.u32 %v973, 7
  %v975 = vsub.s32 %v972, %v974
  %v976 = vrot.slane %v968, %v975
  %v978 = vunpack.c.l.s4 1983009808
  %v979 = vunpack.c.0.s8 %v978
  %v980 = vlaneseq
  %v981 = vshrl.u32 %v980, 7
  %v982 = vsub.s32 %v979, %v981
  %v983 = vrot.slane %v969, %v982
  %v984 = vcombine.low %v928, %v944
  %v985 = vcombine.high %v928, %v944
  %v987 = vunpack.c.l.s4 1934713408
  %v988 = vunpack.c.0.s8 %v987
  %v989 = vlaneseq
  %v990 = vshrl.u32 %v989, 7
  %v991 = vsub.s32 %v988, %v990
  %v992 = vrot.slane %v984, %v991
  %v994 = vunpack.c.l.s4 1934713408
  %v995 = vunpack.c.0.s8 %v994
  %v996 = vlaneseq
  %v997 = vshrl.u32 %v996, 7
  %v998 = vsub.s32 %v995, %v997
  %v999 = vrot.slane %v985, %v998
  %v1000 = vcombine.low %v935, %v951
  %v1001 = vcombine.high %v935, %v951
  %v1003 = vunpack.c.l.s4 1934713408
  %v1004 = vunpack.c.0.s8 %v1003
  %v1005 = vlaneseq
  %v1006 = vshrl.u32 %v1005, 7
  %v1007 = vsub.s32 %v1004, %v1006
  %v1008 = vrot.slane %v1000, %v1007
  %v1010 = vunpack.c.l.s4 1934713408
  %v1011 = vunpack.c.0.s8 %v1010
  %v1012 = vlaneseq
  %v1013 = vshrl.u32 %v1012, 7
  %v1014 = vsub.s32 %v1011, %v1013
  %v1015 = vrot.slane %v1001, %v1014
  %v1016 = vcombine.low %v960, %v976
  %v1017 = vcombine.high %v960, %v976
  %v1019 = vunpack.c.l.s4 1934713408
  %v1020 = vunpack.c.0.s8 %v1019
  %v1021 = vlaneseq
  %v1022 = vshrl.u32 %v1021, 7
  %v1023 = vsub.s32 %v1020, %v1022
  %v1024 = vrot.slane %v1016, %v1023
  %v1026 = vunpack.c.l.s4 1934713408
  %v1027 = vunpack.c.0.s8 %v1026
  %v1028 = vlaneseq
  %v1029 = vshrl.u32 %v1028, 7
  %v1030 = vsub.s32 %v1027, %v1029
  %v1031 = vrot.slane %v1017, %v1030
  %v1032 = vcombine.low %v967, %v983
  %v1033 = vcombine.high %v967, %v983
  %v1035 = vunpack.c.l.s4 1934713408
  %v1036 = vunpack.c.0.s8 %v1035
  %v1037 = vlaneseq
  %v1038 = vshrl.u32 %v1037, 7
  %v1039 = vsub.s32 %v1036, %v1038
  %v1040 = vrot.slane %v1032, %v1039
  %v1042 = vunpack.c.l.s4 1934713408
  %v1043 = vunpack.c.0.s8 %v1042
  %v1044 = vlaneseq
  %v1045 = vshrl.u32 %v1044, 7
  %v1046 = vsub.s32 %v1043, %v1045
  %v1047 = vrot.slane %v1033, %v1046
  %v1048 = vcombine.low %v992, %v1024
  %v1049 = vcombine.high %v992, %v1024
  %v1050 = vcombine.low %v999, %v1031
  %v1051 = vcombine.high %v999, %v1031
  %v1052 = vcombine.low %v1008, %v1040
  %v1053 = vcombine.high %v1008, %v1040
  %v1054 = vcombine.low %v1015, %v1047
  %v1055 = vcombine.high %v1015, %v1047
  %v1056 = vcombine.low %v54, %v109
  %v1057 = vcombine.high %v54, %v109
  %v1059 = vunpack.c.l.s4 1983009808
  %v1060 = vunpack.c.0.s8 %v1059
  %v1061 = vlaneseq
  %v1062 = vshrl.u32 %v1061, 7
  %v1063 = vsub.s32 %v1060, %v1062
  %v1064 = vrot.slane %v1056, %v1063
  %v1066 = vunpack.c.l.s4 1983009808
  %v1067 = vunpack.c.0.s8 %v1066
  %v1068 = vlaneseq
  %v1069 = vshrl.u32 %v1068, 7
  %v1070 = vsub.s32 %v1067, %v1069
  %v1071 = vrot.slane %v1057, %v1070
  %v1072 = vcombine.low %v85, %v133
  %v1073 = vcombine.high %v85, %v133
  %v1075 = vunpack.c.l.s4 1983009808
  %v1076 = vunpack.c.0.s8 %v1075
  %v1077 = vlaneseq
  %v1078 = vshrl.u32 %v1077, 7
  %v1079 = vsub.s32 %v1076, %v1078
  %v1080 = vrot.slane %v1072, %v1079
  %v1082 = vunpack.c.l.s4 1983009808
  %v1083 = vunpack.c.0.s8 %v1082
  %v1084 = vlaneseq
  %v1085 = vshrl.u32 %v1084, 7
  %v1086 = vsub.s32 %v1083, %v1085
  %v1087 = vrot.slane %v1073, %v1086
  %v1088 = vcombine.low %v157, %v205
  %v1089 = vcombine.high %v157, %v205
  %v1091 = vunpack.c.l.s4 1983009808
  %v1092 = vunpack.c.0.s8 %v1091
  %v1093 = vlaneseq
  %v1094 = vshrl.u32 %v1093, 7
  %v1095 = vsub.s32 %v1092, %v1094
  %v1096 = vrot.slane %v1088, %v1095
  %v1098 = vunpack.c.l.s4 1983009808
  %v1099 = vunpack.c.0.s8 %v1098
  %v1100 = vlaneseq
  %v1101 = vshrl.u32 %v1100, 7
  %v1102 = vsub.s32 %v1099, %v1101
  %v1103 = vrot.slane %v1089, %v1102
  %v1104 = vcombine.low %v181, %v229
  %v1105 = vcombine.high %v181, %v229
  %v1107 = vunpack.c.l.s4 1983009808
  %v1108 = vunpack.c.0.s8 %v1107
  %v1109 = vlaneseq
  %v1110 = vshrl.u32 %v1109, 7
  %v1111 = vsub.s32 %v1108, %v1110
  %v1112 = vrot.slane %v1104, %v1111
  %v1114 = vunpack.c.l.s4 1983009808
  %v1115 = vunpack.c.0.s8 %v1114
  %v1116 = vlaneseq
  %v1117 = vshrl.u32 %v1116, 7
  %v1118 = vsub.s32 %v1115, %v1117
  %v1119 = vrot.slane %v1105, %v1118
  %v1120 = vcombine.low %v1064, %v1080
  %v1121 = vcombine.high %v1064, %v1080
  %v1123 = vunpack.c.l.s4 1934713408
  %v1124 = vunpack.c.0.s8 %v1123
  %v1125 = vlaneseq
  %v1126 = vshrl.u32 %v1125, 7
  %v1127 = vsub.s32 %v1124, %v1126
  %v1128 = vrot.slane %v1120, %v1127
  %v1130 = vunpack.c.l.s4 1934713408
  %v1131 = vunpack.c.0.s8 %v1130
  %v1132 = vlaneseq
  %v1133 = vshrl.u32 %v1132, 7
  %v1134 = vsub.s32 %v1131, %v1133
  %v1135 = vrot.slane %v1121, %v1134
  %v1136 = vcombine.low %v1071, %v1087
  %v1137 = vcombine.high %v1071, %v1087
  %v1139 = vunpack.c.l.s4 1934713408
  %v1140 = vunpack.c.0.s8 %v1139
  %v1141 = vlaneseq
  %v1142 = vshrl.u32 %v1141, 7
  %v1143 = vsub.s32 %v1140, %v1142
  %v1144 = vrot.slane %v1136, %v1143
  %v1146 = vunpack.c.l.s4 1934713408
  %v1147 = vunpack.c.0.s8 %v1146
  %v1148 = vlaneseq
  %v1149 = vshrl.u32 %v1148, 7
  %v1150 = vsub.s32 %v1147, %v1149
  %v1151 = vrot.slane %v1137, %v1150
  %v1152 = vcombine.low %v1096, %v1112
  %v1153 = vcombine.high %v1096, %v1112
  %v1155 = vunpack.c.l.s4 1934713408
  %v1156 = vunpack.c.0.s8 %v1155
  %v1157 = vlaneseq
  %v1158 = vshrl.u32 %v1157, 7
  %v1159 = vsub.s32 %v1156, %v1158
  %v1160 = vrot.slane %v1152, %v1159
  %v1162 = vunpack.c.l.s4 1934713408
  %v1163 = vunpack.c.0.s8 %v1162
  %v1164 = vlaneseq
  %v1165 = vshrl.u32 %v1164, 7
  %v1166 = vsub.s32 %v1163, %v1165
  %v1167 = vrot.slane %v1153, %v1166
  %v1168 = vcombine.low %v1103, %v1119
  %v1169 = vcombine.high %v1103, %v1119
  %v1171 = vunpack.c.l.s4 1934713408
  %v1172 = vunpack.c.0.s8 %v1171
  %v1173 = vlaneseq
  %v1174 = vshrl.u32 %v1173, 7
  %v1175 = vsub.s32 %v1172, %v1174
  %v1176 = vrot.slane %v1168, %v1175
  %v1178 = vunpack.c.l.s4 1934713408
  %v1179 = vunpack.c.0.s8 %v1178
  %v1180 = vlaneseq
  %v1181 = vshrl.u32 %v1180, 7
  %v1182 = vsub.s32 %v1179, %v1181
  %v1183 = vrot.slane %v1169, %v1182
  %v1184 = vcombine.low %v1128, %v1160
  %v1185 = vcombine.high %v1128, %v1160
  %v1186 = vcombine.low %v1135, %v1167
  %v1187 = vcombine.high %v1135, %v1167
  %v1188 = vcombine.low %v1144, %v1176
  %v1189 = vcombine.high %v1144, %v1176
  %v1190 = vcombine.low %v1151, %v1183
  %v1191 = vcombine.high %v1151, %v1183
  %v1192 = vcombine.low %v55, %v111
  %v1193 = vcombine.high %v55, %v111
  %v1195 = vunpack.c.l.s4 1983009808
  %v1196 = vunpack.c.0.s8 %v1195
  %v1197 = vlaneseq
  %v1198 = vshrl.u32 %v1197, 7
  %v1199 = vsub.s32 %v1196, %v1198
  %v1200 = vrot.slane %v1192, %v1199
  %v1202 = vunpack.c.l.s4 1983009808
  %v1203 = vunpack.c.0.s8 %v1202
  %v1204 = vlaneseq
  %v1205 = vshrl.u32 %v1204, 7
  %v1206 = vsub.s32 %v1203, %v1205
  %v1207 = vrot.slane %v1193, %v1206
  %v1208 = vcombine.low %v87, %v135
  %v1209 = vcombine.high %v87, %v135
  %v1211 = vunpack.c.l.s4 1983009808
  %v1212 = vunpack.c.0.s8 %v1211
  %v1213 = vlaneseq
  %v1214 = vshrl.u32 %v1213, 7
  %v1215 = vsub.s32 %v1212, %v1214
  %v1216 = vrot.slane %v1208, %v1215
  %v1218 = vunpack.c.l.s4 1983009808
  %v1219 = vunpack.c.0.s8 %v1218
  %v1220 = vlaneseq
  %v1221 = vshrl.u32 %v1220, 7
  %v1222 = vsub.s32 %v1219, %v1221
  %v1223 = vrot.slane %v1209, %v1222
  %v1224 = vcombine.low %v159, %v207
  %v1225 = vcombine.high %v159, %v207
  %v1227 = vunpack.c.l.s4 1983009808
  %v1228 = vunpack.c.0.s8 %v1227
  %v1229 = vlaneseq
  %v1230 = vshrl.u32 %v1229, 7
  %v1231 = vsub.s32 %v1228, %v1230
  %v1232 = vrot.slane %v1224, %v1231
  %v1234 = vunpack.c.l.s4 1983009808
  %v1235 = vunpack.c.0.s8 %v1234
  %v1236 = vlaneseq
  %v1237 = vshrl.u32 %v1236, 7
  %v1238 = vsub.s32 %v1235, %v1237
  %v1239 = vrot.slane %v1225, %v1238
  %v1240 = vcombine.low %v183, %v231
  %v1241 = vcombine.high %v183, %v231
  %v1243 = vunpack.c.l.s4 1983009808
  %v1244 = vunpack.c.0.s8 %v1243
  %v1245 = vlaneseq
  %v1246 = vshrl.u32 %v1245, 7
  %v1247 = vsub.s32 %v1244, %v1246
  %v1248 = vrot.slane %v1240, %v1247
  %v1250 = vunpack.c.l.s4 1983009808
  %v1251 = vunpack.c.0.s8 %v1250
  %v1252 = vlaneseq
  %v1253 = vshrl.u32 %v1252, 7
  %v1254 = vsub.s32 %v1251, %v1253
  %v1255 = vrot.slane %v1241, %v1254
  %v1256 = vcombine.low %v1200, %v1216
  %v1257 = vcombine.high %v1200, %v1216
  %v1259 = vunpack.c.l.s4 1934713408
  %v1260 = vunpack.c.0.s8 %v1259
  %v1261 = vlaneseq
  %v1262 = vshrl.u32 %v1261, 7
  %v1263 = vsub.s32 %v1260, %v1262
  %v1264 = vrot.slane %v1256, %v1263
  %v1266 = vunpack.c.l.s4 1934713408
  %v1267 = vunpack.c.0.s8 %v1266
  %v1268 = vlaneseq
  %v1269 = vshrl.u32 %v1268, 7
  %v1270 = vsub.s32 %v1267, %v1269
  %v1271 = vrot.slane %v1257, %v1270
  %v1272 = vcombine.low %v1207, %v1223
  %v1273 = vcombine.high %v1207, %v1223
  %v1275 = vunpack.c.l.s4 1934713408
  %v1276 = vunpack.c.0.s8 %v1275
  %v1277 = vlaneseq
  %v1278 = vshrl.u32 %v1277, 7
  %v1279 = vsub.s32 %v1276, %v1278
  %v1280 = vrot.slane %v1272, %v1279
  %v1282 = vunpack.c.l.s4 1934713408
  %v1283 = vunpack.c.0.s8 %v1282
  %v1284 = vlaneseq
  %v1285 = vshrl.u32 %v1284, 7
  %v1286 = vsub.s32 %v1283, %v1285
  %v1287 = vrot.slane %v1273, %v1286
  %v1288 = vcombine.low %v1232, %v1248
  %v1289 = vcombine.high %v1232, %v1248
  %v1291 = vunpack.c.l.s4 1934713408
  %v1292 = vunpack.c.0.s8 %v1291
  %v1293 = vlaneseq
  %v1294 = vshrl.u32 %v1293, 7
  %v1295 = vsub.s32 %v1292, %v1294
  %v1296 = vrot.slane %v1288, %v1295
  %v1298 = vunpack.c.l.s4 1934713408
  %v1299 = vunpack.c.0.s8 %v1298
  %v1300 = vlaneseq
  %v1301 = vshrl.u32 %v1300, 7
  %v1302 = vsub.s32 %v1299, %v1301
  %v1303 = vrot.slane %v1289, %v1302
  %v1304 = vcombine.low %v1239, %v1255
  %v1305 = vcombine.high %v1239, %v1255
  %v1307 = vunpack.c.l.s4 1934713408
  %v1308 = vunpack.c.0.s8 %v1307
  %v1309 = vlaneseq
  %v1310 = vshrl.u32 %v1309, 7
  %v1311 = vsub.s32 %v1308, %v1310
  %v1312 = vrot.slane %v1304, %v1311
  %v1314 = vunpack.c.l.s4 1934713408
  %v1315 = vunpack.c.0.s8 %v1314
  %v1316 = vlaneseq
  %v1317 = vshrl.u32 %v1316, 7
  %v1318 = vsub.s32 %v1315, %v1317
  %v1319 = vrot.slane %v1305, %v1318
  %v1320 = vcombine.low %v1264, %v1296
  %v1321 = vcombine.high %v1264, %v1296
  %v1322 = vcombine.low %v1271, %v1303
  %v1323 = vcombine.high %v1271, %v1303
  %v1324 = vcombine.low %v1280, %v1312
  %v1325 = vcombine.high %v1280, %v1312
  %v1326 = vcombine.low %v1287, %v1319
  %v1327 = vcombine.high %v1287, %v1319
  %vm1328 = vcmask 15360
  %v1329 = vsel %vm1328, %v368, -inf
  %1330 = vmax.xlane.f32.xlu0 %v1329
  %v1331 = vpop.xlane.xlu0 %1330
  %v1332 = vsel %vm1328, %v369, -inf
  %1333 = vmax.xlane.f32.xlu0 %v1332
  %v1334 = vpop.xlane.xlu0 %1333
  %v1335 = vsel %vm1328, %v370, -inf
  %1336 = vmax.xlane.f32.xlu0 %v1335
  %v1337 = vpop.xlane.xlu0 %1336
  %v1338 = vsel %vm1328, %v371, -inf
  %1339 = vmax.xlane.f32.xlu0 %v1338
  %v1340 = vpop.xlane.xlu0 %1339
  %v1341 = vsel %vm1328, %v372, -inf
  %1342 = vmax.xlane.f32.xlu0 %v1341
  %v1343 = vpop.xlane.xlu0 %1342
  %v1344 = vsel %vm1328, %v373, -inf
  %1345 = vmax.xlane.f32.xlu0 %v1344
  %v1346 = vpop.xlane.xlu0 %1345
  %v1347 = vsel %vm1328, %v374, -inf
  %1348 = vmax.xlane.f32.xlu0 %v1347
  %v1349 = vpop.xlane.xlu0 %1348
  %v1350 = vsel %vm1328, %v375, -inf
  %1351 = vmax.xlane.f32.xlu0 %v1350
  %v1352 = vpop.xlane.xlu0 %1351
  %v1353 = vsel %vm1328, %v504, -inf
  %1354 = vmax.xlane.f32.xlu0 %v1353
  %v1355 = vpop.xlane.xlu0 %1354
  %v1356 = vsel %vm1328, %v505, -inf
  %1357 = vmax.xlane.f32.xlu0 %v1356
  %v1358 = vpop.xlane.xlu0 %1357
  %v1359 = vsel %vm1328, %v506, -inf
  %1360 = vmax.xlane.f32.xlu0 %v1359
  %v1361 = vpop.xlane.xlu0 %1360
  %v1362 = vsel %vm1328, %v507, -inf
  %1363 = vmax.xlane.f32.xlu0 %v1362
  %v1364 = vpop.xlane.xlu0 %1363
  %v1365 = vsel %vm1328, %v508, -inf
  %1366 = vmax.xlane.f32.xlu0 %v1365
  %v1367 = vpop.xlane.xlu0 %1366
  %v1368 = vsel %vm1328, %v509, -inf
  %1369 = vmax.xlane.f32.xlu0 %v1368
  %v1370 = vpop.xlane.xlu0 %1369
  %v1371 = vsel %vm1328, %v510, -inf
  %1372 = vmax.xlane.f32.xlu0 %v1371
  %v1373 = vpop.xlane.xlu0 %1372
  %v1374 = vsel %vm1328, %v511, -inf
  %1375 = vmax.xlane.f32.xlu0 %v1374
  %v1376 = vpop.xlane.xlu0 %1375
  %v1377 = vsel %vm1328, %v640, -inf
  %1378 = vmax.xlane.f32.xlu0 %v1377
  %v1379 = vpop.xlane.xlu0 %1378
  %v1380 = vsel %vm1328, %v641, -inf
  %1381 = vmax.xlane.f32.xlu0 %v1380
  %v1382 = vpop.xlane.xlu0 %1381
  %v1383 = vsel %vm1328, %v642, -inf
  %1384 = vmax.xlane.f32.xlu0 %v1383
  %v1385 = vpop.xlane.xlu0 %1384
  %v1386 = vsel %vm1328, %v643, -inf
  %1387 = vmax.xlane.f32.xlu0 %v1386
  %v1388 = vpop.xlane.xlu0 %1387
  %v1389 = vsel %vm1328, %v644, -inf
  %1390 = vmax.xlane.f32.xlu0 %v1389
  %v1391 = vpop.xlane.xlu0 %1390
  %v1392 = vsel %vm1328, %v645, -inf
  %1393 = vmax.xlane.f32.xlu0 %v1392
  %v1394 = vpop.xlane.xlu0 %1393
  %v1395 = vsel %vm1328, %v646, -inf
  %1396 = vmax.xlane.f32.xlu0 %v1395
  %v1397 = vpop.xlane.xlu0 %1396
  %v1398 = vsel %vm1328, %v647, -inf
  %1399 = vmax.xlane.f32.xlu0 %v1398
  %v1400 = vpop.xlane.xlu0 %1399
  %v1401 = vsel %vm1328, %v776, -inf
  %1402 = vmax.xlane.f32.xlu0 %v1401
  %v1403 = vpop.xlane.xlu0 %1402
  %v1404 = vsel %vm1328, %v777, -inf
  %1405 = vmax.xlane.f32.xlu0 %v1404
  %v1406 = vpop.xlane.xlu0 %1405
  %v1407 = vsel %vm1328, %v778, -inf
  %1408 = vmax.xlane.f32.xlu0 %v1407
  %v1409 = vpop.xlane.xlu0 %1408
  %v1410 = vsel %vm1328, %v779, -inf
  %1411 = vmax.xlane.f32.xlu0 %v1410
  %v1412 = vpop.xlane.xlu0 %1411
  %v1413 = vsel %vm1328, %v780, -inf
  %1414 = vmax.xlane.f32.xlu0 %v1413
  %v1415 = vpop.xlane.xlu0 %1414
  %v1416 = vsel %vm1328, %v781, -inf
  %1417 = vmax.xlane.f32.xlu0 %v1416
  %v1418 = vpop.xlane.xlu0 %1417
  %v1419 = vsel %vm1328, %v782, -inf
  %1420 = vmax.xlane.f32.xlu0 %v1419
  %v1421 = vpop.xlane.xlu0 %1420
  %v1422 = vsel %vm1328, %v783, -inf
  %1423 = vmax.xlane.f32.xlu0 %v1422
  %v1424 = vpop.xlane.xlu0 %1423
  %v1425 = vsel %vm1328, %v912, -inf
  %1426 = vmax.xlane.f32.xlu0 %v1425
  %v1427 = vpop.xlane.xlu0 %1426
  %v1428 = vsel %vm1328, %v913, -inf
  %1429 = vmax.xlane.f32.xlu0 %v1428
  %v1430 = vpop.xlane.xlu0 %1429
  %v1431 = vsel %vm1328, %v914, -inf
  %1432 = vmax.xlane.f32.xlu0 %v1431
  %v1433 = vpop.xlane.xlu0 %1432
  %v1434 = vsel %vm1328, %v915, -inf
  %1435 = vmax.xlane.f32.xlu0 %v1434
  %v1436 = vpop.xlane.xlu0 %1435
  %v1437 = vsel %vm1328, %v916, -inf
  %1438 = vmax.xlane.f32.xlu0 %v1437
  %v1439 = vpop.xlane.xlu0 %1438
  %v1440 = vsel %vm1328, %v917, -inf
  %1441 = vmax.xlane.f32.xlu0 %v1440
  %v1442 = vpop.xlane.xlu0 %1441
  %v1443 = vsel %vm1328, %v918, -inf
  %1444 = vmax.xlane.f32.xlu0 %v1443
  %v1445 = vpop.xlane.xlu0 %1444
  %v1446 = vsel %vm1328, %v919, -inf
  %1447 = vmax.xlane.f32.xlu0 %v1446
  %v1448 = vpop.xlane.xlu0 %1447
  %v1449 = vsel %vm1328, %v1048, -inf
  %1450 = vmax.xlane.f32.xlu0 %v1449
  %v1451 = vpop.xlane.xlu0 %1450
  %v1452 = vsel %vm1328, %v1049, -inf
  %1453 = vmax.xlane.f32.xlu0 %v1452
  %v1454 = vpop.xlane.xlu0 %1453
  %v1455 = vsel %vm1328, %v1050, -inf
  %1456 = vmax.xlane.f32.xlu0 %v1455
  %v1457 = vpop.xlane.xlu0 %1456
  %v1458 = vsel %vm1328, %v1051, -inf
  %1459 = vmax.xlane.f32.xlu0 %v1458
  %v1460 = vpop.xlane.xlu0 %1459
  %v1461 = vsel %vm1328, %v1052, -inf
  %1462 = vmax.xlane.f32.xlu0 %v1461
  %v1463 = vpop.xlane.xlu0 %1462
  %v1464 = vsel %vm1328, %v1053, -inf
  %1465 = vmax.xlane.f32.xlu0 %v1464
  %v1466 = vpop.xlane.xlu0 %1465
  %v1467 = vsel %vm1328, %v1054, -inf
  %1468 = vmax.xlane.f32.xlu0 %v1467
  %v1469 = vpop.xlane.xlu0 %1468
  %v1470 = vsel %vm1328, %v1055, -inf
  %1471 = vmax.xlane.f32.xlu0 %v1470
  %v1472 = vpop.xlane.xlu0 %1471
  %v1473 = vsel %vm1328, %v1184, -inf
  %1474 = vmax.xlane.f32.xlu0 %v1473
  %v1475 = vpop.xlane.xlu0 %1474
  %v1476 = vsel %vm1328, %v1185, -inf
  %1477 = vmax.xlane.f32.xlu0 %v1476
  %v1478 = vpop.xlane.xlu0 %1477
  %v1479 = vsel %vm1328, %v1186, -inf
  %1480 = vmax.xlane.f32.xlu0 %v1479
  %v1481 = vpop.xlane.xlu0 %1480
  %v1482 = vsel %vm1328, %v1187, -inf
  %1483 = vmax.xlane.f32.xlu0 %v1482
  %v1484 = vpop.xlane.xlu0 %1483
  %v1485 = vsel %vm1328, %v1188, -inf
  %1486 = vmax.xlane.f32.xlu0 %v1485
  %v1487 = vpop.xlane.xlu0 %1486
  %v1488 = vsel %vm1328, %v1189, -inf
  %1489 = vmax.xlane.f32.xlu0 %v1488
  %v1490 = vpop.xlane.xlu0 %1489
  %v1491 = vsel %vm1328, %v1190, -inf
  %1492 = vmax.xlane.f32.xlu0 %v1491
  %v1493 = vpop.xlane.xlu0 %1492
  %v1494 = vsel %vm1328, %v1191, -inf
  %1495 = vmax.xlane.f32.xlu0 %v1494
  %v1496 = vpop.xlane.xlu0 %1495
  %v1497 = vsel %vm1328, %v1320, -inf
  %1498 = vmax.xlane.f32.xlu0 %v1497
  %v1499 = vpop.xlane.xlu0 %1498
  %v1500 = vsel %vm1328, %v1321, -inf
  %1501 = vmax.xlane.f32.xlu0 %v1500
  %v1502 = vpop.xlane.xlu0 %1501
  %v1503 = vsel %vm1328, %v1322, -inf
  %1504 = vmax.xlane.f32.xlu0 %v1503
  %v1505 = vpop.xlane.xlu0 %1504
  %v1506 = vsel %vm1328, %v1323, -inf
  %1507 = vmax.xlane.f32.xlu0 %v1506
  %v1508 = vpop.xlane.xlu0 %1507
  %v1509 = vsel %vm1328, %v1324, -inf
  %1510 = vmax.xlane.f32.xlu0 %v1509
  %v1511 = vpop.xlane.xlu0 %1510
  %v1512 = vsel %vm1328, %v1325, -inf
  %1513 = vmax.xlane.f32.xlu0 %v1512
  %v1514 = vpop.xlane.xlu0 %1513
  %v1515 = vsel %vm1328, %v1326, -inf
  %1516 = vmax.xlane.f32.xlu0 %v1515
  %v1517 = vpop.xlane.xlu0 %1516
  %v1518 = vsel %vm1328, %v1327, -inf
  %1519 = vmax.xlane.f32.xlu0 %v1518
  %v1520 = vpop.xlane.xlu0 %1519
  %1529 = vrot.lane.b32.xlu0 %v56, 126
  %v1530 = vpop.permute.xlu0 %1529
  %1531 = vrot.lane.b32.xlu0 %v57, 126
  %v1532 = vpop.permute.xlu0 %1531
  %1533 = vrot.lane.b32.xlu0 %v58, 126
  %v1534 = vpop.permute.xlu0 %1533
  %1535 = vrot.lane.b32.xlu0 %v59, 126
  %v1536 = vpop.permute.xlu0 %1535
  %1537 = vrot.lane.b32.xlu0 %v60, 126
  %v1538 = vpop.permute.xlu0 %1537
  %1539 = vrot.lane.b32.xlu0 %v61, 126
  %v1540 = vpop.permute.xlu0 %1539
  %1541 = vrot.lane.b32.xlu0 %v62, 126
  %v1542 = vpop.permute.xlu0 %1541
  %1543 = vrot.lane.b32.xlu0 %v63, 126
  %v1544 = vpop.permute.xlu0 %1543
  %1553 = vrot.lane.b32.xlu0 %v56, 124
  %v1554 = vpop.permute.xlu0 %1553
  %1555 = vrot.lane.b32.xlu0 %v57, 124
  %v1556 = vpop.permute.xlu0 %1555
  %1557 = vrot.lane.b32.xlu0 %v58, 124
  %v1558 = vpop.permute.xlu0 %1557
  %1559 = vrot.lane.b32.xlu0 %v59, 124
  %v1560 = vpop.permute.xlu0 %1559
  %1561 = vrot.lane.b32.xlu0 %v60, 124
  %v1562 = vpop.permute.xlu0 %1561
  %1563 = vrot.lane.b32.xlu0 %v61, 124
  %v1564 = vpop.permute.xlu0 %1563
  %1565 = vrot.lane.b32.xlu0 %v62, 124
  %v1566 = vpop.permute.xlu0 %1565
  %1567 = vrot.lane.b32.xlu0 %v63, 124
  %v1568 = vpop.permute.xlu0 %1567
  %1577 = vrot.lane.b32.xlu0 %v56, 122
  %v1578 = vpop.permute.xlu0 %1577
  %1579 = vrot.lane.b32.xlu0 %v57, 122
  %v1580 = vpop.permute.xlu0 %1579
  %1581 = vrot.lane.b32.xlu0 %v58, 122
  %v1582 = vpop.permute.xlu0 %1581
  %1583 = vrot.lane.b32.xlu0 %v59, 122
  %v1584 = vpop.permute.xlu0 %1583
  %1585 = vrot.lane.b32.xlu0 %v60, 122
  %v1586 = vpop.permute.xlu0 %1585
  %1587 = vrot.lane.b32.xlu0 %v61, 122
  %v1588 = vpop.permute.xlu0 %1587
  %1589 = vrot.lane.b32.xlu0 %v62, 122
  %v1590 = vpop.permute.xlu0 %1589
  %1591 = vrot.lane.b32.xlu0 %v63, 122
  %v1592 = vpop.permute.xlu0 %1591
  %1601 = vrot.lane.b32.xlu0 %v56, 120
  %v1602 = vpop.permute.xlu0 %1601
  %1603 = vrot.lane.b32.xlu0 %v57, 120
  %v1604 = vpop.permute.xlu0 %1603
  %1605 = vrot.lane.b32.xlu0 %v58, 120
  %v1606 = vpop.permute.xlu0 %1605
  %1607 = vrot.lane.b32.xlu0 %v59, 120
  %v1608 = vpop.permute.xlu0 %1607
  %1609 = vrot.lane.b32.xlu0 %v60, 120
  %v1610 = vpop.permute.xlu0 %1609
  %1611 = vrot.lane.b32.xlu0 %v61, 120
  %v1612 = vpop.permute.xlu0 %1611
  %1613 = vrot.lane.b32.xlu0 %v62, 120
  %v1614 = vpop.permute.xlu0 %1613
  %1615 = vrot.lane.b32.xlu0 %v63, 120
  %v1616 = vpop.permute.xlu0 %1615
  %1625 = vrot.lane.b32.xlu0 %v56, 118
  %v1626 = vpop.permute.xlu0 %1625
  %1627 = vrot.lane.b32.xlu0 %v57, 118
  %v1628 = vpop.permute.xlu0 %1627
  %1629 = vrot.lane.b32.xlu0 %v58, 118
  %v1630 = vpop.permute.xlu0 %1629
  %1631 = vrot.lane.b32.xlu0 %v59, 118
  %v1632 = vpop.permute.xlu0 %1631
  %1633 = vrot.lane.b32.xlu0 %v60, 118
  %v1634 = vpop.permute.xlu0 %1633
  %1635 = vrot.lane.b32.xlu0 %v61, 118
  %v1636 = vpop.permute.xlu0 %1635
  %1637 = vrot.lane.b32.xlu0 %v62, 118
  %v1638 = vpop.permute.xlu0 %1637
  %1639 = vrot.lane.b32.xlu0 %v63, 118
  %v1640 = vpop.permute.xlu0 %1639
  %1649 = vrot.lane.b32.xlu0 %v56, 116
  %v1650 = vpop.permute.xlu0 %1649
  %1651 = vrot.lane.b32.xlu0 %v57, 116
  %v1652 = vpop.permute.xlu0 %1651
  %1653 = vrot.lane.b32.xlu0 %v58, 116
  %v1654 = vpop.permute.xlu0 %1653
  %1655 = vrot.lane.b32.xlu0 %v59, 116
  %v1656 = vpop.permute.xlu0 %1655
  %1657 = vrot.lane.b32.xlu0 %v60, 116
  %v1658 = vpop.permute.xlu0 %1657
  %1659 = vrot.lane.b32.xlu0 %v61, 116
  %v1660 = vpop.permute.xlu0 %1659
  %1661 = vrot.lane.b32.xlu0 %v62, 116
  %v1662 = vpop.permute.xlu0 %1661
  %1663 = vrot.lane.b32.xlu0 %v63, 116
  %v1664 = vpop.permute.xlu0 %1663
  %1673 = vrot.lane.b32.xlu0 %v56, 114
  %v1674 = vpop.permute.xlu0 %1673
  %1675 = vrot.lane.b32.xlu0 %v57, 114
  %v1676 = vpop.permute.xlu0 %1675
  %1677 = vrot.lane.b32.xlu0 %v58, 114
  %v1678 = vpop.permute.xlu0 %1677
  %1679 = vrot.lane.b32.xlu0 %v59, 114
  %v1680 = vpop.permute.xlu0 %1679
  %1681 = vrot.lane.b32.xlu0 %v60, 114
  %v1682 = vpop.permute.xlu0 %1681
  %1683 = vrot.lane.b32.xlu0 %v61, 114
  %v1684 = vpop.permute.xlu0 %1683
  %1685 = vrot.lane.b32.xlu0 %v62, 114
  %v1686 = vpop.permute.xlu0 %1685
  %1687 = vrot.lane.b32.xlu0 %v63, 114
  %v1688 = vpop.permute.xlu0 %1687
  %v1697 = vcombine.low %v56, %v1554
  %v1698 = vcombine.high %v56, %v1554
  %v1700 = vunpack.c.l.s4 1983009808
  %v1701 = vunpack.c.0.s8 %v1700
  %v1702 = vlaneseq
  %v1703 = vshrl.u32 %v1702, 7
  %v1704 = vsub.s32 %v1701, %v1703
  %v1705 = vrot.slane %v1697, %v1704
  %v1707 = vunpack.c.l.s4 1983009808
  %v1708 = vunpack.c.0.s8 %v1707
  %v1709 = vlaneseq
  %v1710 = vshrl.u32 %v1709, 7
  %v1711 = vsub.s32 %v1708, %v1710
  %v1712 = vrot.slane %v1698, %v1711
  %v1713 = vcombine.low %v1530, %v1578
  %v1714 = vcombine.high %v1530, %v1578
  %v1716 = vunpack.c.l.s4 1983009808
  %v1717 = vunpack.c.0.s8 %v1716
  %v1718 = vlaneseq
  %v1719 = vshrl.u32 %v1718, 7
  %v1720 = vsub.s32 %v1717, %v1719
  %v1721 = vrot.slane %v1713, %v1720
  %v1723 = vunpack.c.l.s4 1983009808
  %v1724 = vunpack.c.0.s8 %v1723
  %v1725 = vlaneseq
  %v1726 = vshrl.u32 %v1725, 7
  %v1727 = vsub.s32 %v1724, %v1726
  %v1728 = vrot.slane %v1714, %v1727
  %v1729 = vcombine.low %v1602, %v1650
  %v1730 = vcombine.high %v1602, %v1650
  %v1732 = vunpack.c.l.s4 1983009808
  %v1733 = vunpack.c.0.s8 %v1732
  %v1734 = vlaneseq
  %v1735 = vshrl.u32 %v1734, 7
  %v1736 = vsub.s32 %v1733, %v1735
  %v1737 = vrot.slane %v1729, %v1736
  %v1739 = vunpack.c.l.s4 1983009808
  %v1740 = vunpack.c.0.s8 %v1739
  %v1741 = vlaneseq
  %v1742 = vshrl.u32 %v1741, 7
  %v1743 = vsub.s32 %v1740, %v1742
  %v1744 = vrot.slane %v1730, %v1743
  %v1745 = vcombine.low %v1626, %v1674
  %v1746 = vcombine.high %v1626, %v1674
  %v1748 = vunpack.c.l.s4 1983009808
  %v1749 = vunpack.c.0.s8 %v1748
  %v1750 = vlaneseq
  %v1751 = vshrl.u32 %v1750, 7
  %v1752 = vsub.s32 %v1749, %v1751
  %v1753 = vrot.slane %v1745, %v1752
  %v1755 = vunpack.c.l.s4 1983009808
  %v1756 = vunpack.c.0.s8 %v1755
  %v1757 = vlaneseq
  %v1758 = vshrl.u32 %v1757, 7
  %v1759 = vsub.s32 %v1756, %v1758
  %v1760 = vrot.slane %v1746, %v1759
  %v1761 = vcombine.low %v1705, %v1721
  %v1762 = vcombine.high %v1705, %v1721
  %v1764 = vunpack.c.l.s4 1934713408
  %v1765 = vunpack.c.0.s8 %v1764
  %v1766 = vlaneseq
  %v1767 = vshrl.u32 %v1766, 7
  %v1768 = vsub.s32 %v1765, %v1767
  %v1769 = vrot.slane %v1761, %v1768
  %v1771 = vunpack.c.l.s4 1934713408
  %v1772 = vunpack.c.0.s8 %v1771
  %v1773 = vlaneseq
  %v1774 = vshrl.u32 %v1773, 7
  %v1775 = vsub.s32 %v1772, %v1774
  %v1776 = vrot.slane %v1762, %v1775
  %v1777 = vcombine.low %v1712, %v1728
  %v1778 = vcombine.high %v1712, %v1728
  %v1780 = vunpack.c.l.s4 1934713408
  %v1781 = vunpack.c.0.s8 %v1780
  %v1782 = vlaneseq
  %v1783 = vshrl.u32 %v1782, 7
  %v1784 = vsub.s32 %v1781, %v1783
  %v1785 = vrot.slane %v1777, %v1784
  %v1787 = vunpack.c.l.s4 1934713408
  %v1788 = vunpack.c.0.s8 %v1787
  %v1789 = vlaneseq
  %v1790 = vshrl.u32 %v1789, 7
  %v1791 = vsub.s32 %v1788, %v1790
  %v1792 = vrot.slane %v1778, %v1791
  %v1793 = vcombine.low %v1737, %v1753
  %v1794 = vcombine.high %v1737, %v1753
  %v1796 = vunpack.c.l.s4 1934713408
  %v1797 = vunpack.c.0.s8 %v1796
  %v1798 = vlaneseq
  %v1799 = vshrl.u32 %v1798, 7
  %v1800 = vsub.s32 %v1797, %v1799
  %v1801 = vrot.slane %v1793, %v1800
  %v1803 = vunpack.c.l.s4 1934713408
  %v1804 = vunpack.c.0.s8 %v1803
  %v1805 = vlaneseq
  %v1806 = vshrl.u32 %v1805, 7
  %v1807 = vsub.s32 %v1804, %v1806
  %v1808 = vrot.slane %v1794, %v1807
  %v1809 = vcombine.low %v1744, %v1760
  %v1810 = vcombine.high %v1744, %v1760
  %v1812 = vunpack.c.l.s4 1934713408
  %v1813 = vunpack.c.0.s8 %v1812
  %v1814 = vlaneseq
  %v1815 = vshrl.u32 %v1814, 7
  %v1816 = vsub.s32 %v1813, %v1815
  %v1817 = vrot.slane %v1809, %v1816
  %v1819 = vunpack.c.l.s4 1934713408
  %v1820 = vunpack.c.0.s8 %v1819
  %v1821 = vlaneseq
  %v1822 = vshrl.u32 %v1821, 7
  %v1823 = vsub.s32 %v1820, %v1822
  %v1824 = vrot.slane %v1810, %v1823
  %v1825 = vcombine.low %v1769, %v1801
  %v1826 = vcombine.high %v1769, %v1801
  %v1827 = vcombine.low %v1776, %v1808
  %v1828 = vcombine.high %v1776, %v1808
  %v1829 = vcombine.low %v1785, %v1817
  %v1830 = vcombine.high %v1785, %v1817
  %v1831 = vcombine.low %v1792, %v1824
  %v1832 = vcombine.high %v1792, %v1824
  %v1833 = vcombine.low %v57, %v1556
  %v1834 = vcombine.high %v57, %v1556
  %v1836 = vunpack.c.l.s4 1983009808
  %v1837 = vunpack.c.0.s8 %v1836
  %v1838 = vlaneseq
  %v1839 = vshrl.u32 %v1838, 7
  %v1840 = vsub.s32 %v1837, %v1839
  %v1841 = vrot.slane %v1833, %v1840
  %v1843 = vunpack.c.l.s4 1983009808
  %v1844 = vunpack.c.0.s8 %v1843
  %v1845 = vlaneseq
  %v1846 = vshrl.u32 %v1845, 7
  %v1847 = vsub.s32 %v1844, %v1846
  %v1848 = vrot.slane %v1834, %v1847
  %v1849 = vcombine.low %v1532, %v1580
  %v1850 = vcombine.high %v1532, %v1580
  %v1852 = vunpack.c.l.s4 1983009808
  %v1853 = vunpack.c.0.s8 %v1852
  %v1854 = vlaneseq
  %v1855 = vshrl.u32 %v1854, 7
  %v1856 = vsub.s32 %v1853, %v1855
  %v1857 = vrot.slane %v1849, %v1856
  %v1859 = vunpack.c.l.s4 1983009808
  %v1860 = vunpack.c.0.s8 %v1859
  %v1861 = vlaneseq
  %v1862 = vshrl.u32 %v1861, 7
  %v1863 = vsub.s32 %v1860, %v1862
  %v1864 = vrot.slane %v1850, %v1863
  %v1865 = vcombine.low %v1604, %v1652
  %v1866 = vcombine.high %v1604, %v1652
  %v1868 = vunpack.c.l.s4 1983009808
  %v1869 = vunpack.c.0.s8 %v1868
  %v1870 = vlaneseq
  %v1871 = vshrl.u32 %v1870, 7
  %v1872 = vsub.s32 %v1869, %v1871
  %v1873 = vrot.slane %v1865, %v1872
  %v1875 = vunpack.c.l.s4 1983009808
  %v1876 = vunpack.c.0.s8 %v1875
  %v1877 = vlaneseq
  %v1878 = vshrl.u32 %v1877, 7
  %v1879 = vsub.s32 %v1876, %v1878
  %v1880 = vrot.slane %v1866, %v1879
  %v1881 = vcombine.low %v1628, %v1676
  %v1882 = vcombine.high %v1628, %v1676
  %v1884 = vunpack.c.l.s4 1983009808
  %v1885 = vunpack.c.0.s8 %v1884
  %v1886 = vlaneseq
  %v1887 = vshrl.u32 %v1886, 7
  %v1888 = vsub.s32 %v1885, %v1887
  %v1889 = vrot.slane %v1881, %v1888
  %v1891 = vunpack.c.l.s4 1983009808
  %v1892 = vunpack.c.0.s8 %v1891
  %v1893 = vlaneseq
  %v1894 = vshrl.u32 %v1893, 7
  %v1895 = vsub.s32 %v1892, %v1894
  %v1896 = vrot.slane %v1882, %v1895
  %v1897 = vcombine.low %v1841, %v1857
  %v1898 = vcombine.high %v1841, %v1857
  %v1900 = vunpack.c.l.s4 1934713408
  %v1901 = vunpack.c.0.s8 %v1900
  %v1902 = vlaneseq
  %v1903 = vshrl.u32 %v1902, 7
  %v1904 = vsub.s32 %v1901, %v1903
  %v1905 = vrot.slane %v1897, %v1904
  %v1907 = vunpack.c.l.s4 1934713408
  %v1908 = vunpack.c.0.s8 %v1907
  %v1909 = vlaneseq
  %v1910 = vshrl.u32 %v1909, 7
  %v1911 = vsub.s32 %v1908, %v1910
  %v1912 = vrot.slane %v1898, %v1911
  %v1913 = vcombine.low %v1848, %v1864
  %v1914 = vcombine.high %v1848, %v1864
  %v1916 = vunpack.c.l.s4 1934713408
  %v1917 = vunpack.c.0.s8 %v1916
  %v1918 = vlaneseq
  %v1919 = vshrl.u32 %v1918, 7
  %v1920 = vsub.s32 %v1917, %v1919
  %v1921 = vrot.slane %v1913, %v1920
  %v1923 = vunpack.c.l.s4 1934713408
  %v1924 = vunpack.c.0.s8 %v1923
  %v1925 = vlaneseq
  %v1926 = vshrl.u32 %v1925, 7
  %v1927 = vsub.s32 %v1924, %v1926
  %v1928 = vrot.slane %v1914, %v1927
  %v1929 = vcombine.low %v1873, %v1889
  %v1930 = vcombine.high %v1873, %v1889
  %v1932 = vunpack.c.l.s4 1934713408
  %v1933 = vunpack.c.0.s8 %v1932
  %v1934 = vlaneseq
  %v1935 = vshrl.u32 %v1934, 7
  %v1936 = vsub.s32 %v1933, %v1935
  %v1937 = vrot.slane %v1929, %v1936
  %v1939 = vunpack.c.l.s4 1934713408
  %v1940 = vunpack.c.0.s8 %v1939
  %v1941 = vlaneseq
  %v1942 = vshrl.u32 %v1941, 7
  %v1943 = vsub.s32 %v1940, %v1942
  %v1944 = vrot.slane %v1930, %v1943
  %v1945 = vcombine.low %v1880, %v1896
  %v1946 = vcombine.high %v1880, %v1896
  %v1948 = vunpack.c.l.s4 1934713408
  %v1949 = vunpack.c.0.s8 %v1948
  %v1950 = vlaneseq
  %v1951 = vshrl.u32 %v1950, 7
  %v1952 = vsub.s32 %v1949, %v1951
  %v1953 = vrot.slane %v1945, %v1952
  %v1955 = vunpack.c.l.s4 1934713408
  %v1956 = vunpack.c.0.s8 %v1955
  %v1957 = vlaneseq
  %v1958 = vshrl.u32 %v1957, 7
  %v1959 = vsub.s32 %v1956, %v1958
  %v1960 = vrot.slane %v1946, %v1959
  %v1961 = vcombine.low %v1905, %v1937
  %v1962 = vcombine.high %v1905, %v1937
  %v1963 = vcombine.low %v1912, %v1944
  %v1964 = vcombine.high %v1912, %v1944
  %v1965 = vcombine.low %v1921, %v1953
  %v1966 = vcombine.high %v1921, %v1953
  %v1967 = vcombine.low %v1928, %v1960
  %v1968 = vcombine.high %v1928, %v1960
  %v1969 = vcombine.low %v58, %v1558
  %v1970 = vcombine.high %v58, %v1558
  %v1972 = vunpack.c.l.s4 1983009808
  %v1973 = vunpack.c.0.s8 %v1972
  %v1974 = vlaneseq
  %v1975 = vshrl.u32 %v1974, 7
  %v1976 = vsub.s32 %v1973, %v1975
  %v1977 = vrot.slane %v1969, %v1976
  %v1979 = vunpack.c.l.s4 1983009808
  %v1980 = vunpack.c.0.s8 %v1979
  %v1981 = vlaneseq
  %v1982 = vshrl.u32 %v1981, 7
  %v1983 = vsub.s32 %v1980, %v1982
  %v1984 = vrot.slane %v1970, %v1983
  %v1985 = vcombine.low %v1534, %v1582
  %v1986 = vcombine.high %v1534, %v1582
  %v1988 = vunpack.c.l.s4 1983009808
  %v1989 = vunpack.c.0.s8 %v1988
  %v1990 = vlaneseq
  %v1991 = vshrl.u32 %v1990, 7
  %v1992 = vsub.s32 %v1989, %v1991
  %v1993 = vrot.slane %v1985, %v1992
  %v1995 = vunpack.c.l.s4 1983009808
  %v1996 = vunpack.c.0.s8 %v1995
  %v1997 = vlaneseq
  %v1998 = vshrl.u32 %v1997, 7
  %v1999 = vsub.s32 %v1996, %v1998
  %v2000 = vrot.slane %v1986, %v1999
  %v2001 = vcombine.low %v1606, %v1654
  %v2002 = vcombine.high %v1606, %v1654
  %v2004 = vunpack.c.l.s4 1983009808
  %v2005 = vunpack.c.0.s8 %v2004
  %v2006 = vlaneseq
  %v2007 = vshrl.u32 %v2006, 7
  %v2008 = vsub.s32 %v2005, %v2007
  %v2009 = vrot.slane %v2001, %v2008
  %v2011 = vunpack.c.l.s4 1983009808
  %v2012 = vunpack.c.0.s8 %v2011
  %v2013 = vlaneseq
  %v2014 = vshrl.u32 %v2013, 7
  %v2015 = vsub.s32 %v2012, %v2014
  %v2016 = vrot.slane %v2002, %v2015
  %v2017 = vcombine.low %v1630, %v1678
  %v2018 = vcombine.high %v1630, %v1678
  %v2020 = vunpack.c.l.s4 1983009808
  %v2021 = vunpack.c.0.s8 %v2020
  %v2022 = vlaneseq
  %v2023 = vshrl.u32 %v2022, 7
  %v2024 = vsub.s32 %v2021, %v2023
  %v2025 = vrot.slane %v2017, %v2024
  %v2027 = vunpack.c.l.s4 1983009808
  %v2028 = vunpack.c.0.s8 %v2027
  %v2029 = vlaneseq
  %v2030 = vshrl.u32 %v2029, 7
  %v2031 = vsub.s32 %v2028, %v2030
  %v2032 = vrot.slane %v2018, %v2031
  %v2033 = vcombine.low %v1977, %v1993
  %v2034 = vcombine.high %v1977, %v1993
  %v2036 = vunpack.c.l.s4 1934713408
  %v2037 = vunpack.c.0.s8 %v2036
  %v2038 = vlaneseq
  %v2039 = vshrl.u32 %v2038, 7
  %v2040 = vsub.s32 %v2037, %v2039
  %v2041 = vrot.slane %v2033, %v2040
  %v2043 = vunpack.c.l.s4 1934713408
  %v2044 = vunpack.c.0.s8 %v2043
  %v2045 = vlaneseq
  %v2046 = vshrl.u32 %v2045, 7
  %v2047 = vsub.s32 %v2044, %v2046
  %v2048 = vrot.slane %v2034, %v2047
  %v2049 = vcombine.low %v1984, %v2000
  %v2050 = vcombine.high %v1984, %v2000
  %v2052 = vunpack.c.l.s4 1934713408
  %v2053 = vunpack.c.0.s8 %v2052
  %v2054 = vlaneseq
  %v2055 = vshrl.u32 %v2054, 7
  %v2056 = vsub.s32 %v2053, %v2055
  %v2057 = vrot.slane %v2049, %v2056
  %v2059 = vunpack.c.l.s4 1934713408
  %v2060 = vunpack.c.0.s8 %v2059
  %v2061 = vlaneseq
  %v2062 = vshrl.u32 %v2061, 7
  %v2063 = vsub.s32 %v2060, %v2062
  %v2064 = vrot.slane %v2050, %v2063
  %v2065 = vcombine.low %v2009, %v2025
  %v2066 = vcombine.high %v2009, %v2025
  %v2068 = vunpack.c.l.s4 1934713408
  %v2069 = vunpack.c.0.s8 %v2068
  %v2070 = vlaneseq
  %v2071 = vshrl.u32 %v2070, 7
  %v2072 = vsub.s32 %v2069, %v2071
  %v2073 = vrot.slane %v2065, %v2072
  %v2075 = vunpack.c.l.s4 1934713408
  %v2076 = vunpack.c.0.s8 %v2075
  %v2077 = vlaneseq
  %v2078 = vshrl.u32 %v2077, 7
  %v2079 = vsub.s32 %v2076, %v2078
  %v2080 = vrot.slane %v2066, %v2079
  %v2081 = vcombine.low %v2016, %v2032
  %v2082 = vcombine.high %v2016, %v2032
  %v2084 = vunpack.c.l.s4 1934713408
  %v2085 = vunpack.c.0.s8 %v2084
  %v2086 = vlaneseq
  %v2087 = vshrl.u32 %v2086, 7
  %v2088 = vsub.s32 %v2085, %v2087
  %v2089 = vrot.slane %v2081, %v2088
  %v2091 = vunpack.c.l.s4 1934713408
  %v2092 = vunpack.c.0.s8 %v2091
  %v2093 = vlaneseq
  %v2094 = vshrl.u32 %v2093, 7
  %v2095 = vsub.s32 %v2092, %v2094
  %v2096 = vrot.slane %v2082, %v2095
  %v2097 = vcombine.low %v2041, %v2073
  %v2098 = vcombine.high %v2041, %v2073
  %v2099 = vcombine.low %v2048, %v2080
  %v2100 = vcombine.high %v2048, %v2080
  %v2101 = vcombine.low %v2057, %v2089
  %v2102 = vcombine.high %v2057, %v2089
  %v2103 = vcombine.low %v2064, %v2096
  %v2104 = vcombine.high %v2064, %v2096
  %v2105 = vcombine.low %v59, %v1560
  %v2106 = vcombine.high %v59, %v1560
  %v2108 = vunpack.c.l.s4 1983009808
  %v2109 = vunpack.c.0.s8 %v2108
  %v2110 = vlaneseq
  %v2111 = vshrl.u32 %v2110, 7
  %v2112 = vsub.s32 %v2109, %v2111
  %v2113 = vrot.slane %v2105, %v2112
  %v2115 = vunpack.c.l.s4 1983009808
  %v2116 = vunpack.c.0.s8 %v2115
  %v2117 = vlaneseq
  %v2118 = vshrl.u32 %v2117, 7
  %v2119 = vsub.s32 %v2116, %v2118
  %v2120 = vrot.slane %v2106, %v2119
  %v2121 = vcombine.low %v1536, %v1584
  %v2122 = vcombine.high %v1536, %v1584
  %v2124 = vunpack.c.l.s4 1983009808
  %v2125 = vunpack.c.0.s8 %v2124
  %v2126 = vlaneseq
  %v2127 = vshrl.u32 %v2126, 7
  %v2128 = vsub.s32 %v2125, %v2127
  %v2129 = vrot.slane %v2121, %v2128
  %v2131 = vunpack.c.l.s4 1983009808
  %v2132 = vunpack.c.0.s8 %v2131
  %v2133 = vlaneseq
  %v2134 = vshrl.u32 %v2133, 7
  %v2135 = vsub.s32 %v2132, %v2134
  %v2136 = vrot.slane %v2122, %v2135
  %v2137 = vcombine.low %v1608, %v1656
  %v2138 = vcombine.high %v1608, %v1656
  %v2140 = vunpack.c.l.s4 1983009808
  %v2141 = vunpack.c.0.s8 %v2140
  %v2142 = vlaneseq
  %v2143 = vshrl.u32 %v2142, 7
  %v2144 = vsub.s32 %v2141, %v2143
  %v2145 = vrot.slane %v2137, %v2144
  %v2147 = vunpack.c.l.s4 1983009808
  %v2148 = vunpack.c.0.s8 %v2147
  %v2149 = vlaneseq
  %v2150 = vshrl.u32 %v2149, 7
  %v2151 = vsub.s32 %v2148, %v2150
  %v2152 = vrot.slane %v2138, %v2151
  %v2153 = vcombine.low %v1632, %v1680
  %v2154 = vcombine.high %v1632, %v1680
  %v2156 = vunpack.c.l.s4 1983009808
  %v2157 = vunpack.c.0.s8 %v2156
  %v2158 = vlaneseq
  %v2159 = vshrl.u32 %v2158, 7
  %v2160 = vsub.s32 %v2157, %v2159
  %v2161 = vrot.slane %v2153, %v2160
  %v2163 = vunpack.c.l.s4 1983009808
  %v2164 = vunpack.c.0.s8 %v2163
  %v2165 = vlaneseq
  %v2166 = vshrl.u32 %v2165, 7
  %v2167 = vsub.s32 %v2164, %v2166
  %v2168 = vrot.slane %v2154, %v2167
  %v2169 = vcombine.low %v2113, %v2129
  %v2170 = vcombine.high %v2113, %v2129
  %v2172 = vunpack.c.l.s4 1934713408
  %v2173 = vunpack.c.0.s8 %v2172
  %v2174 = vlaneseq
  %v2175 = vshrl.u32 %v2174, 7
  %v2176 = vsub.s32 %v2173, %v2175
  %v2177 = vrot.slane %v2169, %v2176
  %v2179 = vunpack.c.l.s4 1934713408
  %v2180 = vunpack.c.0.s8 %v2179
  %v2181 = vlaneseq
  %v2182 = vshrl.u32 %v2181, 7
  %v2183 = vsub.s32 %v2180, %v2182
  %v2184 = vrot.slane %v2170, %v2183
  %v2185 = vcombine.low %v2120, %v2136
  %v2186 = vcombine.high %v2120, %v2136
  %v2188 = vunpack.c.l.s4 1934713408
  %v2189 = vunpack.c.0.s8 %v2188
  %v2190 = vlaneseq
  %v2191 = vshrl.u32 %v2190, 7
  %v2192 = vsub.s32 %v2189, %v2191
  %v2193 = vrot.slane %v2185, %v2192
  %v2195 = vunpack.c.l.s4 1934713408
  %v2196 = vunpack.c.0.s8 %v2195
  %v2197 = vlaneseq
  %v2198 = vshrl.u32 %v2197, 7
  %v2199 = vsub.s32 %v2196, %v2198
  %v2200 = vrot.slane %v2186, %v2199
  %v2201 = vcombine.low %v2145, %v2161
  %v2202 = vcombine.high %v2145, %v2161
  %v2204 = vunpack.c.l.s4 1934713408
  %v2205 = vunpack.c.0.s8 %v2204
  %v2206 = vlaneseq
  %v2207 = vshrl.u32 %v2206, 7
  %v2208 = vsub.s32 %v2205, %v2207
  %v2209 = vrot.slane %v2201, %v2208
  %v2211 = vunpack.c.l.s4 1934713408
  %v2212 = vunpack.c.0.s8 %v2211
  %v2213 = vlaneseq
  %v2214 = vshrl.u32 %v2213, 7
  %v2215 = vsub.s32 %v2212, %v2214
  %v2216 = vrot.slane %v2202, %v2215
  %v2217 = vcombine.low %v2152, %v2168
  %v2218 = vcombine.high %v2152, %v2168
  %v2220 = vunpack.c.l.s4 1934713408
  %v2221 = vunpack.c.0.s8 %v2220
  %v2222 = vlaneseq
  %v2223 = vshrl.u32 %v2222, 7
  %v2224 = vsub.s32 %v2221, %v2223
  %v2225 = vrot.slane %v2217, %v2224
  %v2227 = vunpack.c.l.s4 1934713408
  %v2228 = vunpack.c.0.s8 %v2227
  %v2229 = vlaneseq
  %v2230 = vshrl.u32 %v2229, 7
  %v2231 = vsub.s32 %v2228, %v2230
  %v2232 = vrot.slane %v2218, %v2231
  %v2233 = vcombine.low %v2177, %v2209
  %v2234 = vcombine.high %v2177, %v2209
  %v2235 = vcombine.low %v2184, %v2216
  %v2236 = vcombine.high %v2184, %v2216
  %v2237 = vcombine.low %v2193, %v2225
  %v2238 = vcombine.high %v2193, %v2225
  %v2239 = vcombine.low %v2200, %v2232
  %v2240 = vcombine.high %v2200, %v2232
  %v2241 = vcombine.low %v60, %v1562
  %v2242 = vcombine.high %v60, %v1562
  %v2244 = vunpack.c.l.s4 1983009808
  %v2245 = vunpack.c.0.s8 %v2244
  %v2246 = vlaneseq
  %v2247 = vshrl.u32 %v2246, 7
  %v2248 = vsub.s32 %v2245, %v2247
  %v2249 = vrot.slane %v2241, %v2248
  %v2251 = vunpack.c.l.s4 1983009808
  %v2252 = vunpack.c.0.s8 %v2251
  %v2253 = vlaneseq
  %v2254 = vshrl.u32 %v2253, 7
  %v2255 = vsub.s32 %v2252, %v2254
  %v2256 = vrot.slane %v2242, %v2255
  %v2257 = vcombine.low %v1538, %v1586
  %v2258 = vcombine.high %v1538, %v1586
  %v2260 = vunpack.c.l.s4 1983009808
  %v2261 = vunpack.c.0.s8 %v2260
  %v2262 = vlaneseq
  %v2263 = vshrl.u32 %v2262, 7
  %v2264 = vsub.s32 %v2261, %v2263
  %v2265 = vrot.slane %v2257, %v2264
  %v2267 = vunpack.c.l.s4 1983009808
  %v2268 = vunpack.c.0.s8 %v2267
  %v2269 = vlaneseq
  %v2270 = vshrl.u32 %v2269, 7
  %v2271 = vsub.s32 %v2268, %v2270
  %v2272 = vrot.slane %v2258, %v2271
  %v2273 = vcombine.low %v1610, %v1658
  %v2274 = vcombine.high %v1610, %v1658
  %v2276 = vunpack.c.l.s4 1983009808
  %v2277 = vunpack.c.0.s8 %v2276
  %v2278 = vlaneseq
  %v2279 = vshrl.u32 %v2278, 7
  %v2280 = vsub.s32 %v2277, %v2279
  %v2281 = vrot.slane %v2273, %v2280
  %v2283 = vunpack.c.l.s4 1983009808
  %v2284 = vunpack.c.0.s8 %v2283
  %v2285 = vlaneseq
  %v2286 = vshrl.u32 %v2285, 7
  %v2287 = vsub.s32 %v2284, %v2286
  %v2288 = vrot.slane %v2274, %v2287
  %v2289 = vcombine.low %v1634, %v1682
  %v2290 = vcombine.high %v1634, %v1682
  %v2292 = vunpack.c.l.s4 1983009808
  %v2293 = vunpack.c.0.s8 %v2292
  %v2294 = vlaneseq
  %v2295 = vshrl.u32 %v2294, 7
  %v2296 = vsub.s32 %v2293, %v2295
  %v2297 = vrot.slane %v2289, %v2296
  %v2299 = vunpack.c.l.s4 1983009808
  %v2300 = vunpack.c.0.s8 %v2299
  %v2301 = vlaneseq
  %v2302 = vshrl.u32 %v2301, 7
  %v2303 = vsub.s32 %v2300, %v2302
  %v2304 = vrot.slane %v2290, %v2303
  %v2305 = vcombine.low %v2249, %v2265
  %v2306 = vcombine.high %v2249, %v2265
  %v2308 = vunpack.c.l.s4 1934713408
  %v2309 = vunpack.c.0.s8 %v2308
  %v2310 = vlaneseq
  %v2311 = vshrl.u32 %v2310, 7
  %v2312 = vsub.s32 %v2309, %v2311
  %v2313 = vrot.slane %v2305, %v2312
  %v2315 = vunpack.c.l.s4 1934713408
  %v2316 = vunpack.c.0.s8 %v2315
  %v2317 = vlaneseq
  %v2318 = vshrl.u32 %v2317, 7
  %v2319 = vsub.s32 %v2316, %v2318
  %v2320 = vrot.slane %v2306, %v2319
  %v2321 = vcombine.low %v2256, %v2272
  %v2322 = vcombine.high %v2256, %v2272
  %v2324 = vunpack.c.l.s4 1934713408
  %v2325 = vunpack.c.0.s8 %v2324
  %v2326 = vlaneseq
  %v2327 = vshrl.u32 %v2326, 7
  %v2328 = vsub.s32 %v2325, %v2327
  %v2329 = vrot.slane %v2321, %v2328
  %v2331 = vunpack.c.l.s4 1934713408
  %v2332 = vunpack.c.0.s8 %v2331
  %v2333 = vlaneseq
  %v2334 = vshrl.u32 %v2333, 7
  %v2335 = vsub.s32 %v2332, %v2334
  %v2336 = vrot.slane %v2322, %v2335
  %v2337 = vcombine.low %v2281, %v2297
  %v2338 = vcombine.high %v2281, %v2297
  %v2340 = vunpack.c.l.s4 1934713408
  %v2341 = vunpack.c.0.s8 %v2340
  %v2342 = vlaneseq
  %v2343 = vshrl.u32 %v2342, 7
  %v2344 = vsub.s32 %v2341, %v2343
  %v2345 = vrot.slane %v2337, %v2344
  %v2347 = vunpack.c.l.s4 1934713408
  %v2348 = vunpack.c.0.s8 %v2347
  %v2349 = vlaneseq
  %v2350 = vshrl.u32 %v2349, 7
  %v2351 = vsub.s32 %v2348, %v2350
  %v2352 = vrot.slane %v2338, %v2351
  %v2353 = vcombine.low %v2288, %v2304
  %v2354 = vcombine.high %v2288, %v2304
  %v2356 = vunpack.c.l.s4 1934713408
  %v2357 = vunpack.c.0.s8 %v2356
  %v2358 = vlaneseq
  %v2359 = vshrl.u32 %v2358, 7
  %v2360 = vsub.s32 %v2357, %v2359
  %v2361 = vrot.slane %v2353, %v2360
  %v2363 = vunpack.c.l.s4 1934713408
  %v2364 = vunpack.c.0.s8 %v2363
  %v2365 = vlaneseq
  %v2366 = vshrl.u32 %v2365, 7
  %v2367 = vsub.s32 %v2364, %v2366
  %v2368 = vrot.slane %v2354, %v2367
  %v2369 = vcombine.low %v2313, %v2345
  %v2370 = vcombine.high %v2313, %v2345
  %v2371 = vcombine.low %v2320, %v2352
  %v2372 = vcombine.high %v2320, %v2352
  %v2373 = vcombine.low %v2329, %v2361
  %v2374 = vcombine.high %v2329, %v2361
  %v2375 = vcombine.low %v2336, %v2368
  %v2376 = vcombine.high %v2336, %v2368
  %v2377 = vcombine.low %v61, %v1564
  %v2378 = vcombine.high %v61, %v1564
  %v2380 = vunpack.c.l.s4 1983009808
  %v2381 = vunpack.c.0.s8 %v2380
  %v2382 = vlaneseq
  %v2383 = vshrl.u32 %v2382, 7
  %v2384 = vsub.s32 %v2381, %v2383
  %v2385 = vrot.slane %v2377, %v2384
  %v2387 = vunpack.c.l.s4 1983009808
  %v2388 = vunpack.c.0.s8 %v2387
  %v2389 = vlaneseq
  %v2390 = vshrl.u32 %v2389, 7
  %v2391 = vsub.s32 %v2388, %v2390
  %v2392 = vrot.slane %v2378, %v2391
  %v2393 = vcombine.low %v1540, %v1588
  %v2394 = vcombine.high %v1540, %v1588
  %v2396 = vunpack.c.l.s4 1983009808
  %v2397 = vunpack.c.0.s8 %v2396
  %v2398 = vlaneseq
  %v2399 = vshrl.u32 %v2398, 7
  %v2400 = vsub.s32 %v2397, %v2399
  %v2401 = vrot.slane %v2393, %v2400
  %v2403 = vunpack.c.l.s4 1983009808
  %v2404 = vunpack.c.0.s8 %v2403
  %v2405 = vlaneseq
  %v2406 = vshrl.u32 %v2405, 7
  %v2407 = vsub.s32 %v2404, %v2406
  %v2408 = vrot.slane %v2394, %v2407
  %v2409 = vcombine.low %v1612, %v1660
  %v2410 = vcombine.high %v1612, %v1660
  %v2412 = vunpack.c.l.s4 1983009808
  %v2413 = vunpack.c.0.s8 %v2412
  %v2414 = vlaneseq
  %v2415 = vshrl.u32 %v2414, 7
  %v2416 = vsub.s32 %v2413, %v2415
  %v2417 = vrot.slane %v2409, %v2416
  %v2419 = vunpack.c.l.s4 1983009808
  %v2420 = vunpack.c.0.s8 %v2419
  %v2421 = vlaneseq
  %v2422 = vshrl.u32 %v2421, 7
  %v2423 = vsub.s32 %v2420, %v2422
  %v2424 = vrot.slane %v2410, %v2423
  %v2425 = vcombine.low %v1636, %v1684
  %v2426 = vcombine.high %v1636, %v1684
  %v2428 = vunpack.c.l.s4 1983009808
  %v2429 = vunpack.c.0.s8 %v2428
  %v2430 = vlaneseq
  %v2431 = vshrl.u32 %v2430, 7
  %v2432 = vsub.s32 %v2429, %v2431
  %v2433 = vrot.slane %v2425, %v2432
  %v2435 = vunpack.c.l.s4 1983009808
  %v2436 = vunpack.c.0.s8 %v2435
  %v2437 = vlaneseq
  %v2438 = vshrl.u32 %v2437, 7
  %v2439 = vsub.s32 %v2436, %v2438
  %v2440 = vrot.slane %v2426, %v2439
  %v2441 = vcombine.low %v2385, %v2401
  %v2442 = vcombine.high %v2385, %v2401
  %v2444 = vunpack.c.l.s4 1934713408
  %v2445 = vunpack.c.0.s8 %v2444
  %v2446 = vlaneseq
  %v2447 = vshrl.u32 %v2446, 7
  %v2448 = vsub.s32 %v2445, %v2447
  %v2449 = vrot.slane %v2441, %v2448
  %v2451 = vunpack.c.l.s4 1934713408
  %v2452 = vunpack.c.0.s8 %v2451
  %v2453 = vlaneseq
  %v2454 = vshrl.u32 %v2453, 7
  %v2455 = vsub.s32 %v2452, %v2454
  %v2456 = vrot.slane %v2442, %v2455
  %v2457 = vcombine.low %v2392, %v2408
  %v2458 = vcombine.high %v2392, %v2408
  %v2460 = vunpack.c.l.s4 1934713408
  %v2461 = vunpack.c.0.s8 %v2460
  %v2462 = vlaneseq
  %v2463 = vshrl.u32 %v2462, 7
  %v2464 = vsub.s32 %v2461, %v2463
  %v2465 = vrot.slane %v2457, %v2464
  %v2467 = vunpack.c.l.s4 1934713408
  %v2468 = vunpack.c.0.s8 %v2467
  %v2469 = vlaneseq
  %v2470 = vshrl.u32 %v2469, 7
  %v2471 = vsub.s32 %v2468, %v2470
  %v2472 = vrot.slane %v2458, %v2471
  %v2473 = vcombine.low %v2417, %v2433
  %v2474 = vcombine.high %v2417, %v2433
  %v2476 = vunpack.c.l.s4 1934713408
  %v2477 = vunpack.c.0.s8 %v2476
  %v2478 = vlaneseq
  %v2479 = vshrl.u32 %v2478, 7
  %v2480 = vsub.s32 %v2477, %v2479
  %v2481 = vrot.slane %v2473, %v2480
  %v2483 = vunpack.c.l.s4 1934713408
  %v2484 = vunpack.c.0.s8 %v2483
  %v2485 = vlaneseq
  %v2486 = vshrl.u32 %v2485, 7
  %v2487 = vsub.s32 %v2484, %v2486
  %v2488 = vrot.slane %v2474, %v2487
  %v2489 = vcombine.low %v2424, %v2440
  %v2490 = vcombine.high %v2424, %v2440
  %v2492 = vunpack.c.l.s4 1934713408
  %v2493 = vunpack.c.0.s8 %v2492
  %v2494 = vlaneseq
  %v2495 = vshrl.u32 %v2494, 7
  %v2496 = vsub.s32 %v2493, %v2495
  %v2497 = vrot.slane %v2489, %v2496
  %v2499 = vunpack.c.l.s4 1934713408
  %v2500 = vunpack.c.0.s8 %v2499
  %v2501 = vlaneseq
  %v2502 = vshrl.u32 %v2501, 7
  %v2503 = vsub.s32 %v2500, %v2502
  %v2504 = vrot.slane %v2490, %v2503
  %v2505 = vcombine.low %v2449, %v2481
  %v2506 = vcombine.high %v2449, %v2481
  %v2507 = vcombine.low %v2456, %v2488
  %v2508 = vcombine.high %v2456, %v2488
  %v2509 = vcombine.low %v2465, %v2497
  %v2510 = vcombine.high %v2465, %v2497
  %v2511 = vcombine.low %v2472, %v2504
  %v2512 = vcombine.high %v2472, %v2504
  %v2513 = vcombine.low %v62, %v1566
  %v2514 = vcombine.high %v62, %v1566
  %v2516 = vunpack.c.l.s4 1983009808
  %v2517 = vunpack.c.0.s8 %v2516
  %v2518 = vlaneseq
  %v2519 = vshrl.u32 %v2518, 7
  %v2520 = vsub.s32 %v2517, %v2519
  %v2521 = vrot.slane %v2513, %v2520
  %v2523 = vunpack.c.l.s4 1983009808
  %v2524 = vunpack.c.0.s8 %v2523
  %v2525 = vlaneseq
  %v2526 = vshrl.u32 %v2525, 7
  %v2527 = vsub.s32 %v2524, %v2526
  %v2528 = vrot.slane %v2514, %v2527
  %v2529 = vcombine.low %v1542, %v1590
  %v2530 = vcombine.high %v1542, %v1590
  %v2532 = vunpack.c.l.s4 1983009808
  %v2533 = vunpack.c.0.s8 %v2532
  %v2534 = vlaneseq
  %v2535 = vshrl.u32 %v2534, 7
  %v2536 = vsub.s32 %v2533, %v2535
  %v2537 = vrot.slane %v2529, %v2536
  %v2539 = vunpack.c.l.s4 1983009808
  %v2540 = vunpack.c.0.s8 %v2539
  %v2541 = vlaneseq
  %v2542 = vshrl.u32 %v2541, 7
  %v2543 = vsub.s32 %v2540, %v2542
  %v2544 = vrot.slane %v2530, %v2543
  %v2545 = vcombine.low %v1614, %v1662
  %v2546 = vcombine.high %v1614, %v1662
  %v2548 = vunpack.c.l.s4 1983009808
  %v2549 = vunpack.c.0.s8 %v2548
  %v2550 = vlaneseq
  %v2551 = vshrl.u32 %v2550, 7
  %v2552 = vsub.s32 %v2549, %v2551
  %v2553 = vrot.slane %v2545, %v2552
  %v2555 = vunpack.c.l.s4 1983009808
  %v2556 = vunpack.c.0.s8 %v2555
  %v2557 = vlaneseq
  %v2558 = vshrl.u32 %v2557, 7
  %v2559 = vsub.s32 %v2556, %v2558
  %v2560 = vrot.slane %v2546, %v2559
  %v2561 = vcombine.low %v1638, %v1686
  %v2562 = vcombine.high %v1638, %v1686
  %v2564 = vunpack.c.l.s4 1983009808
  %v2565 = vunpack.c.0.s8 %v2564
  %v2566 = vlaneseq
  %v2567 = vshrl.u32 %v2566, 7
  %v2568 = vsub.s32 %v2565, %v2567
  %v2569 = vrot.slane %v2561, %v2568
  %v2571 = vunpack.c.l.s4 1983009808
  %v2572 = vunpack.c.0.s8 %v2571
  %v2573 = vlaneseq
  %v2574 = vshrl.u32 %v2573, 7
  %v2575 = vsub.s32 %v2572, %v2574
  %v2576 = vrot.slane %v2562, %v2575
  %v2577 = vcombine.low %v2521, %v2537
  %v2578 = vcombine.high %v2521, %v2537
  %v2580 = vunpack.c.l.s4 1934713408
  %v2581 = vunpack.c.0.s8 %v2580
  %v2582 = vlaneseq
  %v2583 = vshrl.u32 %v2582, 7
  %v2584 = vsub.s32 %v2581, %v2583
  %v2585 = vrot.slane %v2577, %v2584
  %v2587 = vunpack.c.l.s4 1934713408
  %v2588 = vunpack.c.0.s8 %v2587
  %v2589 = vlaneseq
  %v2590 = vshrl.u32 %v2589, 7
  %v2591 = vsub.s32 %v2588, %v2590
  %v2592 = vrot.slane %v2578, %v2591
  %v2593 = vcombine.low %v2528, %v2544
  %v2594 = vcombine.high %v2528, %v2544
  %v2596 = vunpack.c.l.s4 1934713408
  %v2597 = vunpack.c.0.s8 %v2596
  %v2598 = vlaneseq
  %v2599 = vshrl.u32 %v2598, 7
  %v2600 = vsub.s32 %v2597, %v2599
  %v2601 = vrot.slane %v2593, %v2600
  %v2603 = vunpack.c.l.s4 1934713408
  %v2604 = vunpack.c.0.s8 %v2603
  %v2605 = vlaneseq
  %v2606 = vshrl.u32 %v2605, 7
  %v2607 = vsub.s32 %v2604, %v2606
  %v2608 = vrot.slane %v2594, %v2607
  %v2609 = vcombine.low %v2553, %v2569
  %v2610 = vcombine.high %v2553, %v2569
  %v2612 = vunpack.c.l.s4 1934713408
  %v2613 = vunpack.c.0.s8 %v2612
  %v2614 = vlaneseq
  %v2615 = vshrl.u32 %v2614, 7
  %v2616 = vsub.s32 %v2613, %v2615
  %v2617 = vrot.slane %v2609, %v2616
  %v2619 = vunpack.c.l.s4 1934713408
  %v2620 = vunpack.c.0.s8 %v2619
  %v2621 = vlaneseq
  %v2622 = vshrl.u32 %v2621, 7
  %v2623 = vsub.s32 %v2620, %v2622
  %v2624 = vrot.slane %v2610, %v2623
  %v2625 = vcombine.low %v2560, %v2576
  %v2626 = vcombine.high %v2560, %v2576
  %v2628 = vunpack.c.l.s4 1934713408
  %v2629 = vunpack.c.0.s8 %v2628
  %v2630 = vlaneseq
  %v2631 = vshrl.u32 %v2630, 7
  %v2632 = vsub.s32 %v2629, %v2631
  %v2633 = vrot.slane %v2625, %v2632
  %v2635 = vunpack.c.l.s4 1934713408
  %v2636 = vunpack.c.0.s8 %v2635
  %v2637 = vlaneseq
  %v2638 = vshrl.u32 %v2637, 7
  %v2639 = vsub.s32 %v2636, %v2638
  %v2640 = vrot.slane %v2626, %v2639
  %v2641 = vcombine.low %v2585, %v2617
  %v2642 = vcombine.high %v2585, %v2617
  %v2643 = vcombine.low %v2592, %v2624
  %v2644 = vcombine.high %v2592, %v2624
  %v2645 = vcombine.low %v2601, %v2633
  %v2646 = vcombine.high %v2601, %v2633
  %v2647 = vcombine.low %v2608, %v2640
  %v2648 = vcombine.high %v2608, %v2640
  %v2649 = vcombine.low %v63, %v1568
  %v2650 = vcombine.high %v63, %v1568
  %v2652 = vunpack.c.l.s4 1983009808
  %v2653 = vunpack.c.0.s8 %v2652
  %v2654 = vlaneseq
  %v2655 = vshrl.u32 %v2654, 7
  %v2656 = vsub.s32 %v2653, %v2655
  %v2657 = vrot.slane %v2649, %v2656
  %v2659 = vunpack.c.l.s4 1983009808
  %v2660 = vunpack.c.0.s8 %v2659
  %v2661 = vlaneseq
  %v2662 = vshrl.u32 %v2661, 7
  %v2663 = vsub.s32 %v2660, %v2662
  %v2664 = vrot.slane %v2650, %v2663
  %v2665 = vcombine.low %v1544, %v1592
  %v2666 = vcombine.high %v1544, %v1592
  %v2668 = vunpack.c.l.s4 1983009808
  %v2669 = vunpack.c.0.s8 %v2668
  %v2670 = vlaneseq
  %v2671 = vshrl.u32 %v2670, 7
  %v2672 = vsub.s32 %v2669, %v2671
  %v2673 = vrot.slane %v2665, %v2672
  %v2675 = vunpack.c.l.s4 1983009808
  %v2676 = vunpack.c.0.s8 %v2675
  %v2677 = vlaneseq
  %v2678 = vshrl.u32 %v2677, 7
  %v2679 = vsub.s32 %v2676, %v2678
  %v2680 = vrot.slane %v2666, %v2679
  %v2681 = vcombine.low %v1616, %v1664
  %v2682 = vcombine.high %v1616, %v1664
  %v2684 = vunpack.c.l.s4 1983009808
  %v2685 = vunpack.c.0.s8 %v2684
  %v2686 = vlaneseq
  %v2687 = vshrl.u32 %v2686, 7
  %v2688 = vsub.s32 %v2685, %v2687
  %v2689 = vrot.slane %v2681, %v2688
  %v2691 = vunpack.c.l.s4 1983009808
  %v2692 = vunpack.c.0.s8 %v2691
  %v2693 = vlaneseq
  %v2694 = vshrl.u32 %v2693, 7
  %v2695 = vsub.s32 %v2692, %v2694
  %v2696 = vrot.slane %v2682, %v2695
  %v2697 = vcombine.low %v1640, %v1688
  %v2698 = vcombine.high %v1640, %v1688
  %v2700 = vunpack.c.l.s4 1983009808
  %v2701 = vunpack.c.0.s8 %v2700
  %v2702 = vlaneseq
  %v2703 = vshrl.u32 %v2702, 7
  %v2704 = vsub.s32 %v2701, %v2703
  %v2705 = vrot.slane %v2697, %v2704
  %v2707 = vunpack.c.l.s4 1983009808
  %v2708 = vunpack.c.0.s8 %v2707
  %v2709 = vlaneseq
  %v2710 = vshrl.u32 %v2709, 7
  %v2711 = vsub.s32 %v2708, %v2710
  %v2712 = vrot.slane %v2698, %v2711
  %v2713 = vcombine.low %v2657, %v2673
  %v2714 = vcombine.high %v2657, %v2673
  %v2716 = vunpack.c.l.s4 1934713408
  %v2717 = vunpack.c.0.s8 %v2716
  %v2718 = vlaneseq
  %v2719 = vshrl.u32 %v2718, 7
  %v2720 = vsub.s32 %v2717, %v2719
  %v2721 = vrot.slane %v2713, %v2720
  %v2723 = vunpack.c.l.s4 1934713408
  %v2724 = vunpack.c.0.s8 %v2723
  %v2725 = vlaneseq
  %v2726 = vshrl.u32 %v2725, 7
  %v2727 = vsub.s32 %v2724, %v2726
  %v2728 = vrot.slane %v2714, %v2727
  %v2729 = vcombine.low %v2664, %v2680
  %v2730 = vcombine.high %v2664, %v2680
  %v2732 = vunpack.c.l.s4 1934713408
  %v2733 = vunpack.c.0.s8 %v2732
  %v2734 = vlaneseq
  %v2735 = vshrl.u32 %v2734, 7
  %v2736 = vsub.s32 %v2733, %v2735
  %v2737 = vrot.slane %v2729, %v2736
  %v2739 = vunpack.c.l.s4 1934713408
  %v2740 = vunpack.c.0.s8 %v2739
  %v2741 = vlaneseq
  %v2742 = vshrl.u32 %v2741, 7
  %v2743 = vsub.s32 %v2740, %v2742
  %v2744 = vrot.slane %v2730, %v2743
  %v2745 = vcombine.low %v2689, %v2705
  %v2746 = vcombine.high %v2689, %v2705
  %v2748 = vunpack.c.l.s4 1934713408
  %v2749 = vunpack.c.0.s8 %v2748
  %v2750 = vlaneseq
  %v2751 = vshrl.u32 %v2750, 7
  %v2752 = vsub.s32 %v2749, %v2751
  %v2753 = vrot.slane %v2745, %v2752
  %v2755 = vunpack.c.l.s4 1934713408
  %v2756 = vunpack.c.0.s8 %v2755
  %v2757 = vlaneseq
  %v2758 = vshrl.u32 %v2757, 7
  %v2759 = vsub.s32 %v2756, %v2758
  %v2760 = vrot.slane %v2746, %v2759
  %v2761 = vcombine.low %v2696, %v2712
  %v2762 = vcombine.high %v2696, %v2712
  %v2764 = vunpack.c.l.s4 1934713408
  %v2765 = vunpack.c.0.s8 %v2764
  %v2766 = vlaneseq
  %v2767 = vshrl.u32 %v2766, 7
  %v2768 = vsub.s32 %v2765, %v2767
  %v2769 = vrot.slane %v2761, %v2768
  %v2771 = vunpack.c.l.s4 1934713408
  %v2772 = vunpack.c.0.s8 %v2771
  %v2773 = vlaneseq
  %v2774 = vshrl.u32 %v2773, 7
  %v2775 = vsub.s32 %v2772, %v2774
  %v2776 = vrot.slane %v2762, %v2775
  %v2777 = vcombine.low %v2721, %v2753
  %v2778 = vcombine.high %v2721, %v2753
  %v2779 = vcombine.low %v2728, %v2760
  %v2780 = vcombine.high %v2728, %v2760
  %v2781 = vcombine.low %v2737, %v2769
  %v2782 = vcombine.high %v2737, %v2769
  %v2783 = vcombine.low %v2744, %v2776
  %v2784 = vcombine.high %v2744, %v2776
  %v2785 = vsel %vm1328, %v1825, inf
  %2786 = vmin.xlane.f32.xlu0 %v2785
  %v2787 = vpop.xlane.xlu0 %2786
  %v2788 = vsel %vm1328, %v1826, inf
  %2789 = vmin.xlane.f32.xlu0 %v2788
  %v2790 = vpop.xlane.xlu0 %2789
  %v2791 = vsel %vm1328, %v1827, inf
  %2792 = vmin.xlane.f32.xlu0 %v2791
  %v2793 = vpop.xlane.xlu0 %2792
  %v2794 = vsel %vm1328, %v1828, inf
  %2795 = vmin.xlane.f32.xlu0 %v2794
  %v2796 = vpop.xlane.xlu0 %2795
  %v2797 = vsel %vm1328, %v1829, inf
  %2798 = vmin.xlane.f32.xlu0 %v2797
  %v2799 = vpop.xlane.xlu0 %2798
  %v2800 = vsel %vm1328, %v1830, inf
  %2801 = vmin.xlane.f32.xlu0 %v2800
  %v2802 = vpop.xlane.xlu0 %2801
  %v2803 = vsel %vm1328, %v1831, inf
  %2804 = vmin.xlane.f32.xlu0 %v2803
  %v2805 = vpop.xlane.xlu0 %2804
  %v2806 = vsel %vm1328, %v1832, inf
  %2807 = vmin.xlane.f32.xlu0 %v2806
  %v2808 = vpop.xlane.xlu0 %2807
  %v2809 = vsel %vm1328, %v1961, inf
  %2810 = vmin.xlane.f32.xlu0 %v2809
  %v2811 = vpop.xlane.xlu0 %2810
  %v2812 = vsel %vm1328, %v1962, inf
  %2813 = vmin.xlane.f32.xlu0 %v2812
  %v2814 = vpop.xlane.xlu0 %2813
  %v2815 = vsel %vm1328, %v1963, inf
  %2816 = vmin.xlane.f32.xlu0 %v2815
  %v2817 = vpop.xlane.xlu0 %2816
  %v2818 = vsel %vm1328, %v1964, inf
  %2819 = vmin.xlane.f32.xlu0 %v2818
  %v2820 = vpop.xlane.xlu0 %2819
  %v2821 = vsel %vm1328, %v1965, inf
  %2822 = vmin.xlane.f32.xlu0 %v2821
  %v2823 = vpop.xlane.xlu0 %2822
  %v2824 = vsel %vm1328, %v1966, inf
  %2825 = vmin.xlane.f32.xlu0 %v2824
  %v2826 = vpop.xlane.xlu0 %2825
  %v2827 = vsel %vm1328, %v1967, inf
  %2828 = vmin.xlane.f32.xlu0 %v2827
  %v2829 = vpop.xlane.xlu0 %2828
  %v2830 = vsel %vm1328, %v1968, inf
  %2831 = vmin.xlane.f32.xlu0 %v2830
  %v2832 = vpop.xlane.xlu0 %2831
  %v2833 = vsel %vm1328, %v2097, inf
  %2834 = vmin.xlane.f32.xlu0 %v2833
  %v2835 = vpop.xlane.xlu0 %2834
  %v2836 = vsel %vm1328, %v2098, inf
  %2837 = vmin.xlane.f32.xlu0 %v2836
  %v2838 = vpop.xlane.xlu0 %2837
  %v2839 = vsel %vm1328, %v2099, inf
  %2840 = vmin.xlane.f32.xlu0 %v2839
  %v2841 = vpop.xlane.xlu0 %2840
  %v2842 = vsel %vm1328, %v2100, inf
  %2843 = vmin.xlane.f32.xlu0 %v2842
  %v2844 = vpop.xlane.xlu0 %2843
  %v2845 = vsel %vm1328, %v2101, inf
  %2846 = vmin.xlane.f32.xlu0 %v2845
  %v2847 = vpop.xlane.xlu0 %2846
  %v2848 = vsel %vm1328, %v2102, inf
  %2849 = vmin.xlane.f32.xlu0 %v2848
  %v2850 = vpop.xlane.xlu0 %2849
  %v2851 = vsel %vm1328, %v2103, inf
  %2852 = vmin.xlane.f32.xlu0 %v2851
  %v2853 = vpop.xlane.xlu0 %2852
  %v2854 = vsel %vm1328, %v2104, inf
  %2855 = vmin.xlane.f32.xlu0 %v2854
  %v2856 = vpop.xlane.xlu0 %2855
  %v2857 = vsel %vm1328, %v2233, inf
  %2858 = vmin.xlane.f32.xlu0 %v2857
  %v2859 = vpop.xlane.xlu0 %2858
  %v2860 = vsel %vm1328, %v2234, inf
  %2861 = vmin.xlane.f32.xlu0 %v2860
  %v2862 = vpop.xlane.xlu0 %2861
  %v2863 = vsel %vm1328, %v2235, inf
  %2864 = vmin.xlane.f32.xlu0 %v2863
  %v2865 = vpop.xlane.xlu0 %2864
  %v2866 = vsel %vm1328, %v2236, inf
  %2867 = vmin.xlane.f32.xlu0 %v2866
  %v2868 = vpop.xlane.xlu0 %2867
  %v2869 = vsel %vm1328, %v2237, inf
  %2870 = vmin.xlane.f32.xlu0 %v2869
  %v2871 = vpop.xlane.xlu0 %2870
  %v2872 = vsel %vm1328, %v2238, inf
  %2873 = vmin.xlane.f32.xlu0 %v2872
  %v2874 = vpop.xlane.xlu0 %2873
  %v2875 = vsel %vm1328, %v2239, inf
  %2876 = vmin.xlane.f32.xlu0 %v2875
  %v2877 = vpop.xlane.xlu0 %2876
  %v2878 = vsel %vm1328, %v2240, inf
  %2879 = vmin.xlane.f32.xlu0 %v2878
  %v2880 = vpop.xlane.xlu0 %2879
  %v2881 = vsel %vm1328, %v2369, inf
  %2882 = vmin.xlane.f32.xlu0 %v2881
  %v2883 = vpop.xlane.xlu0 %2882
  %v2884 = vsel %vm1328, %v2370, inf
  %2885 = vmin.xlane.f32.xlu0 %v2884
  %v2886 = vpop.xlane.xlu0 %2885
  %v2887 = vsel %vm1328, %v2371, inf
  %2888 = vmin.xlane.f32.xlu0 %v2887
  %v2889 = vpop.xlane.xlu0 %2888
  %v2890 = vsel %vm1328, %v2372, inf
  %2891 = vmin.xlane.f32.xlu0 %v2890
  %v2892 = vpop.xlane.xlu0 %2891
  %v2893 = vsel %vm1328, %v2373, inf
  %2894 = vmin.xlane.f32.xlu0 %v2893
  %v2895 = vpop.xlane.xlu0 %2894
  %v2896 = vsel %vm1328, %v2374, inf
  %2897 = vmin.xlane.f32.xlu0 %v2896
  %v2898 = vpop.xlane.xlu0 %2897
  %v2899 = vsel %vm1328, %v2375, inf
  %2900 = vmin.xlane.f32.xlu0 %v2899
  %v2901 = vpop.xlane.xlu0 %2900
  %v2902 = vsel %vm1328, %v2376, inf
  %2903 = vmin.xlane.f32.xlu0 %v2902
  %v2904 = vpop.xlane.xlu0 %2903
  %v2905 = vsel %vm1328, %v2505, inf
  %2906 = vmin.xlane.f32.xlu0 %v2905
  %v2907 = vpop.xlane.xlu0 %2906
  %v2908 = vsel %vm1328, %v2506, inf
  %2909 = vmin.xlane.f32.xlu0 %v2908
  %v2910 = vpop.xlane.xlu0 %2909
  %v2911 = vsel %vm1328, %v2507, inf
  %2912 = vmin.xlane.f32.xlu0 %v2911
  %v2913 = vpop.xlane.xlu0 %2912
  %v2914 = vsel %vm1328, %v2508, inf
  %2915 = vmin.xlane.f32.xlu0 %v2914
  %v2916 = vpop.xlane.xlu0 %2915
  %v2917 = vsel %vm1328, %v2509, inf
  %2918 = vmin.xlane.f32.xlu0 %v2917
  %v2919 = vpop.xlane.xlu0 %2918
  %v2920 = vsel %vm1328, %v2510, inf
  %2921 = vmin.xlane.f32.xlu0 %v2920
  %v2922 = vpop.xlane.xlu0 %2921
  %v2923 = vsel %vm1328, %v2511, inf
  %2924 = vmin.xlane.f32.xlu0 %v2923
  %v2925 = vpop.xlane.xlu0 %2924
  %v2926 = vsel %vm1328, %v2512, inf
  %2927 = vmin.xlane.f32.xlu0 %v2926
  %v2928 = vpop.xlane.xlu0 %2927
  %v2929 = vsel %vm1328, %v2641, inf
  %2930 = vmin.xlane.f32.xlu0 %v2929
  %v2931 = vpop.xlane.xlu0 %2930
  %v2932 = vsel %vm1328, %v2642, inf
  %2933 = vmin.xlane.f32.xlu0 %v2932
  %v2934 = vpop.xlane.xlu0 %2933
  %v2935 = vsel %vm1328, %v2643, inf
  %2936 = vmin.xlane.f32.xlu0 %v2935
  %v2937 = vpop.xlane.xlu0 %2936
  %v2938 = vsel %vm1328, %v2644, inf
  %2939 = vmin.xlane.f32.xlu0 %v2938
  %v2940 = vpop.xlane.xlu0 %2939
  %v2941 = vsel %vm1328, %v2645, inf
  %2942 = vmin.xlane.f32.xlu0 %v2941
  %v2943 = vpop.xlane.xlu0 %2942
  %v2944 = vsel %vm1328, %v2646, inf
  %2945 = vmin.xlane.f32.xlu0 %v2944
  %v2946 = vpop.xlane.xlu0 %2945
  %v2947 = vsel %vm1328, %v2647, inf
  %2948 = vmin.xlane.f32.xlu0 %v2947
  %v2949 = vpop.xlane.xlu0 %2948
  %v2950 = vsel %vm1328, %v2648, inf
  %2951 = vmin.xlane.f32.xlu0 %v2950
  %v2952 = vpop.xlane.xlu0 %2951
  %v2953 = vsel %vm1328, %v2777, inf
  %2954 = vmin.xlane.f32.xlu0 %v2953
  %v2955 = vpop.xlane.xlu0 %2954
  %v2956 = vsel %vm1328, %v2778, inf
  %2957 = vmin.xlane.f32.xlu0 %v2956
  %v2958 = vpop.xlane.xlu0 %2957
  %v2959 = vsel %vm1328, %v2779, inf
  %2960 = vmin.xlane.f32.xlu0 %v2959
  %v2961 = vpop.xlane.xlu0 %2960
  %v2962 = vsel %vm1328, %v2780, inf
  %2963 = vmin.xlane.f32.xlu0 %v2962
  %v2964 = vpop.xlane.xlu0 %2963
  %v2965 = vsel %vm1328, %v2781, inf
  %2966 = vmin.xlane.f32.xlu0 %v2965
  %v2967 = vpop.xlane.xlu0 %2966
  %v2968 = vsel %vm1328, %v2782, inf
  %2969 = vmin.xlane.f32.xlu0 %v2968
  %v2970 = vpop.xlane.xlu0 %2969
  %v2971 = vsel %vm1328, %v2783, inf
  %2972 = vmin.xlane.f32.xlu0 %v2971
  %v2973 = vpop.xlane.xlu0 %2972
  %v2974 = vsel %vm1328, %v2784, inf
  %2975 = vmin.xlane.f32.xlu0 %v2974
  %v2976 = vpop.xlane.xlu0 %2975
  %v2977 = vsub.f32 0.0, %v2787
  %v2978 = vsub.f32 0.0, %v2790
  %v2979 = vsub.f32 0.0, %v2793
  %v2980 = vsub.f32 0.0, %v2796
  %v2981 = vsub.f32 0.0, %v2799
  %v2982 = vsub.f32 0.0, %v2802
  %v2983 = vsub.f32 0.0, %v2805
  %v2984 = vsub.f32 0.0, %v2808
  %v2985 = vsub.f32 0.0, %v2811
  %v2986 = vsub.f32 0.0, %v2814
  %v2987 = vsub.f32 0.0, %v2817
  %v2988 = vsub.f32 0.0, %v2820
  %v2989 = vsub.f32 0.0, %v2823
  %v2990 = vsub.f32 0.0, %v2826
  %v2991 = vsub.f32 0.0, %v2829
  %v2992 = vsub.f32 0.0, %v2832
  %v2993 = vsub.f32 0.0, %v2835
  %v2994 = vsub.f32 0.0, %v2838
  %v2995 = vsub.f32 0.0, %v2841
  %v2996 = vsub.f32 0.0, %v2844
  %v2997 = vsub.f32 0.0, %v2847
  %v2998 = vsub.f32 0.0, %v2850
  %v2999 = vsub.f32 0.0, %v2853
  %v3000 = vsub.f32 0.0, %v2856
  %v3001 = vsub.f32 0.0, %v2859
  %v3002 = vsub.f32 0.0, %v2862
  %v3003 = vsub.f32 0.0, %v2865
  %v3004 = vsub.f32 0.0, %v2868
  %v3005 = vsub.f32 0.0, %v2871
  %v3006 = vsub.f32 0.0, %v2874
  %v3007 = vsub.f32 0.0, %v2877
  %v3008 = vsub.f32 0.0, %v2880
  %v3009 = vsub.f32 0.0, %v2883
  %v3010 = vsub.f32 0.0, %v2886
  %v3011 = vsub.f32 0.0, %v2889
  %v3012 = vsub.f32 0.0, %v2892
  %v3013 = vsub.f32 0.0, %v2895
  %v3014 = vsub.f32 0.0, %v2898
  %v3015 = vsub.f32 0.0, %v2901
  %v3016 = vsub.f32 0.0, %v2904
  %v3017 = vsub.f32 0.0, %v2907
  %v3018 = vsub.f32 0.0, %v2910
  %v3019 = vsub.f32 0.0, %v2913
  %v3020 = vsub.f32 0.0, %v2916
  %v3021 = vsub.f32 0.0, %v2919
  %v3022 = vsub.f32 0.0, %v2922
  %v3023 = vsub.f32 0.0, %v2925
  %v3024 = vsub.f32 0.0, %v2928
  %v3025 = vsub.f32 0.0, %v2931
  %v3026 = vsub.f32 0.0, %v2934
  %v3027 = vsub.f32 0.0, %v2937
  %v3028 = vsub.f32 0.0, %v2940
  %v3029 = vsub.f32 0.0, %v2943
  %v3030 = vsub.f32 0.0, %v2946
  %v3031 = vsub.f32 0.0, %v2949
  %v3032 = vsub.f32 0.0, %v2952
  %v3033 = vsub.f32 0.0, %v2955
  %v3034 = vsub.f32 0.0, %v2958
  %v3035 = vsub.f32 0.0, %v2961
  %v3036 = vsub.f32 0.0, %v2964
  %v3037 = vsub.f32 0.0, %v2967
  %v3038 = vsub.f32 0.0, %v2970
  %v3039 = vsub.f32 0.0, %v2973
  %v3040 = vsub.f32 0.0, %v2976
  %vm3041 = vcmp.ge.f32.partialorder %v1331, %v2977
  %vm3042 = vcmp.ge.f32.partialorder %v1334, %v2978
  %vm3043 = vcmp.ge.f32.partialorder %v1337, %v2979
  %vm3044 = vcmp.ge.f32.partialorder %v1340, %v2980
  %vm3045 = vcmp.ge.f32.partialorder %v1343, %v2981
  %vm3046 = vcmp.ge.f32.partialorder %v1346, %v2982
  %vm3047 = vcmp.ge.f32.partialorder %v1349, %v2983
  %vm3048 = vcmp.ge.f32.partialorder %v1352, %v2984
  %vm3049 = vcmp.ge.f32.partialorder %v1355, %v2985
  %vm3050 = vcmp.ge.f32.partialorder %v1358, %v2986
  %vm3051 = vcmp.ge.f32.partialorder %v1361, %v2987
  %vm3052 = vcmp.ge.f32.partialorder %v1364, %v2988
  %vm3053 = vcmp.ge.f32.partialorder %v1367, %v2989
  %vm3054 = vcmp.ge.f32.partialorder %v1370, %v2990
  %vm3055 = vcmp.ge.f32.partialorder %v1373, %v2991
  %vm3056 = vcmp.ge.f32.partialorder %v1376, %v2992
  %vm3057 = vcmp.ge.f32.partialorder %v1379, %v2993
  %vm3058 = vcmp.ge.f32.partialorder %v1382, %v2994
  %vm3059 = vcmp.ge.f32.partialorder %v1385, %v2995
  %vm3060 = vcmp.ge.f32.partialorder %v1388, %v2996
  %vm3061 = vcmp.ge.f32.partialorder %v1391, %v2997
  %vm3062 = vcmp.ge.f32.partialorder %v1394, %v2998
  %vm3063 = vcmp.ge.f32.partialorder %v1397, %v2999
  %vm3064 = vcmp.ge.f32.partialorder %v1400, %v3000
  %vm3065 = vcmp.ge.f32.partialorder %v1403, %v3001
  %vm3066 = vcmp.ge.f32.partialorder %v1406, %v3002
  %vm3067 = vcmp.ge.f32.partialorder %v1409, %v3003
  %vm3068 = vcmp.ge.f32.partialorder %v1412, %v3004
  %vm3069 = vcmp.ge.f32.partialorder %v1415, %v3005
  %vm3070 = vcmp.ge.f32.partialorder %v1418, %v3006
  %vm3071 = vcmp.ge.f32.partialorder %v1421, %v3007
  %vm3072 = vcmp.ge.f32.partialorder %v1424, %v3008
  %vm3073 = vcmp.ge.f32.partialorder %v1427, %v3009
  %vm3074 = vcmp.ge.f32.partialorder %v1430, %v3010
  %vm3075 = vcmp.ge.f32.partialorder %v1433, %v3011
  %vm3076 = vcmp.ge.f32.partialorder %v1436, %v3012
  %vm3077 = vcmp.ge.f32.partialorder %v1439, %v3013
  %vm3078 = vcmp.ge.f32.partialorder %v1442, %v3014
  %vm3079 = vcmp.ge.f32.partialorder %v1445, %v3015
  %vm3080 = vcmp.ge.f32.partialorder %v1448, %v3016
  %vm3081 = vcmp.ge.f32.partialorder %v1451, %v3017
  %vm3082 = vcmp.ge.f32.partialorder %v1454, %v3018
  %vm3083 = vcmp.ge.f32.partialorder %v1457, %v3019
  %vm3084 = vcmp.ge.f32.partialorder %v1460, %v3020
  %vm3085 = vcmp.ge.f32.partialorder %v1463, %v3021
  %vm3086 = vcmp.ge.f32.partialorder %v1466, %v3022
  %vm3087 = vcmp.ge.f32.partialorder %v1469, %v3023
  %vm3088 = vcmp.ge.f32.partialorder %v1472, %v3024
  %vm3089 = vcmp.ge.f32.partialorder %v1475, %v3025
  %vm3090 = vcmp.ge.f32.partialorder %v1478, %v3026
  %vm3091 = vcmp.ge.f32.partialorder %v1481, %v3027
  %vm3092 = vcmp.ge.f32.partialorder %v1484, %v3028
  %vm3093 = vcmp.ge.f32.partialorder %v1487, %v3029
  %vm3094 = vcmp.ge.f32.partialorder %v1490, %v3030
  %vm3095 = vcmp.ge.f32.partialorder %v1493, %v3031
  %vm3096 = vcmp.ge.f32.partialorder %v1496, %v3032
  %vm3097 = vcmp.ge.f32.partialorder %v1499, %v3033
  %vm3098 = vcmp.ge.f32.partialorder %v1502, %v3034
  %vm3099 = vcmp.ge.f32.partialorder %v1505, %v3035
  %vm3100 = vcmp.ge.f32.partialorder %v1508, %v3036
  %vm3101 = vcmp.ge.f32.partialorder %v1511, %v3037
  %vm3102 = vcmp.ge.f32.partialorder %v1514, %v3038
  %vm3103 = vcmp.ge.f32.partialorder %v1517, %v3039
  %vm3104 = vcmp.ge.f32.partialorder %v1520, %v3040
  %v3105 = vsel %vm3041, %v1331, %v2787
  %v3106 = vsel %vm3042, %v1334, %v2790
  %v3107 = vsel %vm3043, %v1337, %v2793
  %v3108 = vsel %vm3044, %v1340, %v2796
  %v3109 = vsel %vm3045, %v1343, %v2799
  %v3110 = vsel %vm3046, %v1346, %v2802
  %v3111 = vsel %vm3047, %v1349, %v2805
  %v3112 = vsel %vm3048, %v1352, %v2808
  %v3113 = vsel %vm3049, %v1355, %v2811
  %v3114 = vsel %vm3050, %v1358, %v2814
  %v3115 = vsel %vm3051, %v1361, %v2817
  %v3116 = vsel %vm3052, %v1364, %v2820
  %v3117 = vsel %vm3053, %v1367, %v2823
  %v3118 = vsel %vm3054, %v1370, %v2826
  %v3119 = vsel %vm3055, %v1373, %v2829
  %v3120 = vsel %vm3056, %v1376, %v2832
  %v3121 = vsel %vm3057, %v1379, %v2835
  %v3122 = vsel %vm3058, %v1382, %v2838
  %v3123 = vsel %vm3059, %v1385, %v2841
  %v3124 = vsel %vm3060, %v1388, %v2844
  %v3125 = vsel %vm3061, %v1391, %v2847
  %v3126 = vsel %vm3062, %v1394, %v2850
  %v3127 = vsel %vm3063, %v1397, %v2853
  %v3128 = vsel %vm3064, %v1400, %v2856
  %v3129 = vsel %vm3065, %v1403, %v2859
  %v3130 = vsel %vm3066, %v1406, %v2862
  %v3131 = vsel %vm3067, %v1409, %v2865
  %v3132 = vsel %vm3068, %v1412, %v2868
  %v3133 = vsel %vm3069, %v1415, %v2871
  %v3134 = vsel %vm3070, %v1418, %v2874
  %v3135 = vsel %vm3071, %v1421, %v2877
  %v3136 = vsel %vm3072, %v1424, %v2880
  %v3137 = vsel %vm3073, %v1427, %v2883
  %v3138 = vsel %vm3074, %v1430, %v2886
  %v3139 = vsel %vm3075, %v1433, %v2889
  %v3140 = vsel %vm3076, %v1436, %v2892
  %v3141 = vsel %vm3077, %v1439, %v2895
  %v3142 = vsel %vm3078, %v1442, %v2898
  %v3143 = vsel %vm3079, %v1445, %v2901
  %v3144 = vsel %vm3080, %v1448, %v2904
  %v3145 = vsel %vm3081, %v1451, %v2907
  %v3146 = vsel %vm3082, %v1454, %v2910
  %v3147 = vsel %vm3083, %v1457, %v2913
  %v3148 = vsel %vm3084, %v1460, %v2916
  %v3149 = vsel %vm3085, %v1463, %v2919
  %v3150 = vsel %vm3086, %v1466, %v2922
  %v3151 = vsel %vm3087, %v1469, %v2925
  %v3152 = vsel %vm3088, %v1472, %v2928
  %v3153 = vsel %vm3089, %v1475, %v2931
  %v3154 = vsel %vm3090, %v1478, %v2934
  %v3155 = vsel %vm3091, %v1481, %v2937
  %v3156 = vsel %vm3092, %v1484, %v2940
  %v3157 = vsel %vm3093, %v1487, %v2943
  %v3158 = vsel %vm3094, %v1490, %v2946
  %v3159 = vsel %vm3095, %v1493, %v2949
  %v3160 = vsel %vm3096, %v1496, %v2952
  %v3161 = vsel %vm3097, %v1499, %v2955
  %v3162 = vsel %vm3098, %v1502, %v2958
  %v3163 = vsel %vm3099, %v1505, %v2961
  %v3164 = vsel %vm3100, %v1508, %v2964
  %v3165 = vsel %vm3101, %v1511, %v2967
  %v3166 = vsel %vm3102, %v1514, %v2970
  %v3167 = vsel %vm3103, %v1517, %v2973
  %v3168 = vsel %vm3104, %v1520, %v2976
  %v3233 = vlaneseq
  %v3234 = vand.u32 %v3233, 127
  %v3235 = vlaneseq
  %v3236 = vshrl.u32 %v3235, 7
  %v3237 = vsub.s32 %v3234, %v3236
  %v3238 = vrot.slane %v3105, %v3237
  %v3239 = vlaneseq
  %v3240 = vshrl.u32 %v3239, 7
  %v3241 = vsub.s32 %v3234, %v3240
  %v3242 = vrot.slane %v3106, %v3241
  %v3243 = vlaneseq
  %v3244 = vshrl.u32 %v3243, 7
  %v3245 = vsub.s32 %v3234, %v3244
  %v3246 = vrot.slane %v3107, %v3245
  %v3247 = vlaneseq
  %v3248 = vshrl.u32 %v3247, 7
  %v3249 = vsub.s32 %v3234, %v3248
  %v3250 = vrot.slane %v3108, %v3249
  %v3251 = vlaneseq
  %v3252 = vshrl.u32 %v3251, 7
  %v3253 = vsub.s32 %v3234, %v3252
  %v3254 = vrot.slane %v3109, %v3253
  %v3255 = vlaneseq
  %v3256 = vshrl.u32 %v3255, 7
  %v3257 = vsub.s32 %v3234, %v3256
  %v3258 = vrot.slane %v3110, %v3257
  %v3259 = vlaneseq
  %v3260 = vshrl.u32 %v3259, 7
  %v3261 = vsub.s32 %v3234, %v3260
  %v3262 = vrot.slane %v3111, %v3261
  %v3263 = vlaneseq
  %v3264 = vshrl.u32 %v3263, 7
  %v3265 = vsub.s32 %v3234, %v3264
  %v3266 = vrot.slane %v3112, %v3265
  %v3267 = vlaneseq
  %v3268 = vshrl.u32 %v3267, 7
  %v3269 = vsub.s32 %v3234, %v3268
  %v3270 = vrot.slane %v3113, %v3269
  %v3271 = vlaneseq
  %v3272 = vshrl.u32 %v3271, 7
  %v3273 = vsub.s32 %v3234, %v3272
  %v3274 = vrot.slane %v3114, %v3273
  %v3275 = vlaneseq
  %v3276 = vshrl.u32 %v3275, 7
  %v3277 = vsub.s32 %v3234, %v3276
  %v3278 = vrot.slane %v3115, %v3277
  %v3279 = vlaneseq
  %v3280 = vshrl.u32 %v3279, 7
  %v3281 = vsub.s32 %v3234, %v3280
  %v3282 = vrot.slane %v3116, %v3281
  %v3283 = vlaneseq
  %v3284 = vshrl.u32 %v3283, 7
  %v3285 = vsub.s32 %v3234, %v3284
  %v3286 = vrot.slane %v3117, %v3285
  %v3287 = vlaneseq
  %v3288 = vshrl.u32 %v3287, 7
  %v3289 = vsub.s32 %v3234, %v3288
  %v3290 = vrot.slane %v3118, %v3289
  %v3291 = vlaneseq
  %v3292 = vshrl.u32 %v3291, 7
  %v3293 = vsub.s32 %v3234, %v3292
  %v3294 = vrot.slane %v3119, %v3293
  %v3295 = vlaneseq
  %v3296 = vshrl.u32 %v3295, 7
  %v3297 = vsub.s32 %v3234, %v3296
  %v3298 = vrot.slane %v3120, %v3297
  %v3299 = vlaneseq
  %v3300 = vshrl.u32 %v3299, 7
  %v3301 = vsub.s32 %v3234, %v3300
  %v3302 = vrot.slane %v3121, %v3301
  %v3303 = vlaneseq
  %v3304 = vshrl.u32 %v3303, 7
  %v3305 = vsub.s32 %v3234, %v3304
  %v3306 = vrot.slane %v3122, %v3305
  %v3307 = vlaneseq
  %v3308 = vshrl.u32 %v3307, 7
  %v3309 = vsub.s32 %v3234, %v3308
  %v3310 = vrot.slane %v3123, %v3309
  %v3311 = vlaneseq
  %v3312 = vshrl.u32 %v3311, 7
  %v3313 = vsub.s32 %v3234, %v3312
  %v3314 = vrot.slane %v3124, %v3313
  %v3315 = vlaneseq
  %v3316 = vshrl.u32 %v3315, 7
  %v3317 = vsub.s32 %v3234, %v3316
  %v3318 = vrot.slane %v3125, %v3317
  %v3319 = vlaneseq
  %v3320 = vshrl.u32 %v3319, 7
  %v3321 = vsub.s32 %v3234, %v3320
  %v3322 = vrot.slane %v3126, %v3321
  %v3323 = vlaneseq
  %v3324 = vshrl.u32 %v3323, 7
  %v3325 = vsub.s32 %v3234, %v3324
  %v3326 = vrot.slane %v3127, %v3325
  %v3327 = vlaneseq
  %v3328 = vshrl.u32 %v3327, 7
  %v3329 = vsub.s32 %v3234, %v3328
  %v3330 = vrot.slane %v3128, %v3329
  %v3331 = vlaneseq
  %v3332 = vshrl.u32 %v3331, 7
  %v3333 = vsub.s32 %v3234, %v3332
  %v3334 = vrot.slane %v3129, %v3333
  %v3335 = vlaneseq
  %v3336 = vshrl.u32 %v3335, 7
  %v3337 = vsub.s32 %v3234, %v3336
  %v3338 = vrot.slane %v3130, %v3337
  %v3339 = vlaneseq
  %v3340 = vshrl.u32 %v3339, 7
  %v3341 = vsub.s32 %v3234, %v3340
  %v3342 = vrot.slane %v3131, %v3341
  %v3343 = vlaneseq
  %v3344 = vshrl.u32 %v3343, 7
  %v3345 = vsub.s32 %v3234, %v3344
  %v3346 = vrot.slane %v3132, %v3345
  %v3347 = vlaneseq
  %v3348 = vshrl.u32 %v3347, 7
  %v3349 = vsub.s32 %v3234, %v3348
  %v3350 = vrot.slane %v3133, %v3349
  %v3351 = vlaneseq
  %v3352 = vshrl.u32 %v3351, 7
  %v3353 = vsub.s32 %v3234, %v3352
  %v3354 = vrot.slane %v3134, %v3353
  %v3355 = vlaneseq
  %v3356 = vshrl.u32 %v3355, 7
  %v3357 = vsub.s32 %v3234, %v3356
  %v3358 = vrot.slane %v3135, %v3357
  %v3359 = vlaneseq
  %v3360 = vshrl.u32 %v3359, 7
  %v3361 = vsub.s32 %v3234, %v3360
  %v3362 = vrot.slane %v3136, %v3361
  %v3363 = vlaneseq
  %v3364 = vshrl.u32 %v3363, 7
  %v3365 = vsub.s32 %v3234, %v3364
  %v3366 = vrot.slane %v3137, %v3365
  %v3367 = vlaneseq
  %v3368 = vshrl.u32 %v3367, 7
  %v3369 = vsub.s32 %v3234, %v3368
  %v3370 = vrot.slane %v3138, %v3369
  %v3371 = vlaneseq
  %v3372 = vshrl.u32 %v3371, 7
  %v3373 = vsub.s32 %v3234, %v3372
  %v3374 = vrot.slane %v3139, %v3373
  %v3375 = vlaneseq
  %v3376 = vshrl.u32 %v3375, 7
  %v3377 = vsub.s32 %v3234, %v3376
  %v3378 = vrot.slane %v3140, %v3377
  %v3379 = vlaneseq
  %v3380 = vshrl.u32 %v3379, 7
  %v3381 = vsub.s32 %v3234, %v3380
  %v3382 = vrot.slane %v3141, %v3381
  %v3383 = vlaneseq
  %v3384 = vshrl.u32 %v3383, 7
  %v3385 = vsub.s32 %v3234, %v3384
  %v3386 = vrot.slane %v3142, %v3385
  %v3387 = vlaneseq
  %v3388 = vshrl.u32 %v3387, 7
  %v3389 = vsub.s32 %v3234, %v3388
  %v3390 = vrot.slane %v3143, %v3389
  %v3391 = vlaneseq
  %v3392 = vshrl.u32 %v3391, 7
  %v3393 = vsub.s32 %v3234, %v3392
  %v3394 = vrot.slane %v3144, %v3393
  %v3395 = vlaneseq
  %v3396 = vshrl.u32 %v3395, 7
  %v3397 = vsub.s32 %v3234, %v3396
  %v3398 = vrot.slane %v3145, %v3397
  %v3399 = vlaneseq
  %v3400 = vshrl.u32 %v3399, 7
  %v3401 = vsub.s32 %v3234, %v3400
  %v3402 = vrot.slane %v3146, %v3401
  %v3403 = vlaneseq
  %v3404 = vshrl.u32 %v3403, 7
  %v3405 = vsub.s32 %v3234, %v3404
  %v3406 = vrot.slane %v3147, %v3405
  %v3407 = vlaneseq
  %v3408 = vshrl.u32 %v3407, 7
  %v3409 = vsub.s32 %v3234, %v3408
  %v3410 = vrot.slane %v3148, %v3409
  %v3411 = vlaneseq
  %v3412 = vshrl.u32 %v3411, 7
  %v3413 = vsub.s32 %v3234, %v3412
  %v3414 = vrot.slane %v3149, %v3413
  %v3415 = vlaneseq
  %v3416 = vshrl.u32 %v3415, 7
  %v3417 = vsub.s32 %v3234, %v3416
  %v3418 = vrot.slane %v3150, %v3417
  %v3419 = vlaneseq
  %v3420 = vshrl.u32 %v3419, 7
  %v3421 = vsub.s32 %v3234, %v3420
  %v3422 = vrot.slane %v3151, %v3421
  %v3423 = vlaneseq
  %v3424 = vshrl.u32 %v3423, 7
  %v3425 = vsub.s32 %v3234, %v3424
  %v3426 = vrot.slane %v3152, %v3425
  %v3427 = vlaneseq
  %v3428 = vshrl.u32 %v3427, 7
  %v3429 = vsub.s32 %v3234, %v3428
  %v3430 = vrot.slane %v3153, %v3429
  %v3431 = vlaneseq
  %v3432 = vshrl.u32 %v3431, 7
  %v3433 = vsub.s32 %v3234, %v3432
  %v3434 = vrot.slane %v3154, %v3433
  %v3435 = vlaneseq
  %v3436 = vshrl.u32 %v3435, 7
  %v3437 = vsub.s32 %v3234, %v3436
  %v3438 = vrot.slane %v3155, %v3437
  %v3439 = vlaneseq
  %v3440 = vshrl.u32 %v3439, 7
  %v3441 = vsub.s32 %v3234, %v3440
  %v3442 = vrot.slane %v3156, %v3441
  %v3443 = vlaneseq
  %v3444 = vshrl.u32 %v3443, 7
  %v3445 = vsub.s32 %v3234, %v3444
  %v3446 = vrot.slane %v3157, %v3445
  %v3447 = vlaneseq
  %v3448 = vshrl.u32 %v3447, 7
  %v3449 = vsub.s32 %v3234, %v3448
  %v3450 = vrot.slane %v3158, %v3449
  %v3451 = vlaneseq
  %v3452 = vshrl.u32 %v3451, 7
  %v3453 = vsub.s32 %v3234, %v3452
  %v3454 = vrot.slane %v3159, %v3453
  %v3455 = vlaneseq
  %v3456 = vshrl.u32 %v3455, 7
  %v3457 = vsub.s32 %v3234, %v3456
  %v3458 = vrot.slane %v3160, %v3457
  %v3459 = vlaneseq
  %v3460 = vshrl.u32 %v3459, 7
  %v3461 = vsub.s32 %v3234, %v3460
  %v3462 = vrot.slane %v3161, %v3461
  %v3463 = vlaneseq
  %v3464 = vshrl.u32 %v3463, 7
  %v3465 = vsub.s32 %v3234, %v3464
  %v3466 = vrot.slane %v3162, %v3465
  %v3467 = vlaneseq
  %v3468 = vshrl.u32 %v3467, 7
  %v3469 = vsub.s32 %v3234, %v3468
  %v3470 = vrot.slane %v3163, %v3469
  %v3471 = vlaneseq
  %v3472 = vshrl.u32 %v3471, 7
  %v3473 = vsub.s32 %v3234, %v3472
  %v3474 = vrot.slane %v3164, %v3473
  %v3475 = vlaneseq
  %v3476 = vshrl.u32 %v3475, 7
  %v3477 = vsub.s32 %v3234, %v3476
  %v3478 = vrot.slane %v3165, %v3477
  %v3479 = vlaneseq
  %v3480 = vshrl.u32 %v3479, 7
  %v3481 = vsub.s32 %v3234, %v3480
  %v3482 = vrot.slane %v3166, %v3481
  %v3483 = vlaneseq
  %v3484 = vshrl.u32 %v3483, 7
  %v3485 = vsub.s32 %v3234, %v3484
  %v3486 = vrot.slane %v3167, %v3485
  %v3487 = vlaneseq
  %v3488 = vshrl.u32 %v3487, 7
  %v3489 = vsub.s32 %v3234, %v3488
  %v3490 = vrot.slane %v3168, %v3489
  %vm3491 = vcmask 1041409
  %v3492 = vsel %vm3491, %v3242, %v3238
  %vm3493 = vcmask 1042434
  %v3494 = vsel %vm3493, %v3246, %v3492
  %vm3495 = vcmask 1043459
  %v3496 = vsel %vm3495, %v3250, %v3494
  %vm3497 = vcmask 1044484
  %v3498 = vsel %vm3497, %v3254, %v3496
  %vm3499 = vcmask 1045509
  %v3500 = vsel %vm3499, %v3258, %v3498
  %vm3501 = vcmask 1046534
  %v3502 = vsel %vm3501, %v3262, %v3500
  %vm3503 = vcmask 1047559
  %v3504 = vsel %vm3503, %v3266, %v3502
  %v3505 = vsel %vm3491, %v3274, %v3270
  %v3506 = vsel %vm3493, %v3278, %v3505
  %v3507 = vsel %vm3495, %v3282, %v3506
  %v3508 = vsel %vm3497, %v3286, %v3507
  %v3509 = vsel %vm3499, %v3290, %v3508
  %v3510 = vsel %vm3501, %v3294, %v3509
  %v3511 = vsel %vm3503, %v3298, %v3510
  %v3512 = vsel %vm3491, %v3306, %v3302
  %v3513 = vsel %vm3493, %v3310, %v3512
  %v3514 = vsel %vm3495, %v3314, %v3513
  %v3515 = vsel %vm3497, %v3318, %v3514
  %v3516 = vsel %vm3499, %v3322, %v3515
  %v3517 = vsel %vm3501, %v3326, %v3516
  %v3518 = vsel %vm3503, %v3330, %v3517
  %v3519 = vsel %vm3491, %v3338, %v3334
  %v3520 = vsel %vm3493, %v3342, %v3519
  %v3521 = vsel %vm3495, %v3346, %v3520
  %v3522 = vsel %vm3497, %v3350, %v3521
  %v3523 = vsel %vm3499, %v3354, %v3522
  %v3524 = vsel %vm3501, %v3358, %v3523
  %v3525 = vsel %vm3503, %v3362, %v3524
  %v3526 = vsel %vm3491, %v3370, %v3366
  %v3527 = vsel %vm3493, %v3374, %v3526
  %v3528 = vsel %vm3495, %v3378, %v3527
  %v3529 = vsel %vm3497, %v3382, %v3528
  %v3530 = vsel %vm3499, %v3386, %v3529
  %v3531 = vsel %vm3501, %v3390, %v3530
  %v3532 = vsel %vm3503, %v3394, %v3531
  %v3533 = vsel %vm3491, %v3402, %v3398
  %v3534 = vsel %vm3493, %v3406, %v3533
  %v3535 = vsel %vm3495, %v3410, %v3534
  %v3536 = vsel %vm3497, %v3414, %v3535
  %v3537 = vsel %vm3499, %v3418, %v3536
  %v3538 = vsel %vm3501, %v3422, %v3537
  %v3539 = vsel %vm3503, %v3426, %v3538
  %v3540 = vsel %vm3491, %v3434, %v3430
  %v3541 = vsel %vm3493, %v3438, %v3540
  %v3542 = vsel %vm3495, %v3442, %v3541
  %v3543 = vsel %vm3497, %v3446, %v3542
  %v3544 = vsel %vm3499, %v3450, %v3543
  %v3545 = vsel %vm3501, %v3454, %v3544
  %v3546 = vsel %vm3503, %v3458, %v3545
  %v3547 = vsel %vm3491, %v3466, %v3462
  %v3548 = vsel %vm3493, %v3470, %v3547
  %v3549 = vsel %vm3495, %v3474, %v3548
  %v3550 = vsel %vm3497, %v3478, %v3549
  %v3551 = vsel %vm3499, %v3482, %v3550
  %v3552 = vsel %vm3501, %v3486, %v3551
  %v3553 = vsel %vm3503, %v3490, %v3552
  %vm3562 = vcmask 64512
  %3563 = vst.msk [vmem:[%s1] sm:$0xff] %vm3562, %v3504
  %3564 = vst.msk [vmem:[%s1 + $0x8] sm:$0xff] %vm3562, %v3511
  %3565 = vst.msk [vmem:[%s1 + $0x10] sm:$0xff] %vm3562, %v3518
  %3566 = vst.msk [vmem:[%s1 + $0x18] sm:$0xff] %vm3562, %v3525
  %3567 = vst.msk [vmem:[%s1 + $0x20] sm:$0xff] %vm3562, %v3532
  %3568 = vst.msk [vmem:[%s1 + $0x28] sm:$0xff] %vm3562, %v3539
  %3569 = vst.msk [vmem:[%s1 + $0x30] sm:$0xff] %vm3562, %v3546
  %3570 = vst.msk [vmem:[%s1 + $0x38] sm:$0xff] %vm3562, %v3553
  // Predicated region
  $region6: #{tpu_custom_call.1} parent=0 // pred_check
    _
  $region7: #{tpu_custom_call.1} parent=0 // pred_check_branch
    %3572 = sbr.rel (0) target = $region9
  $region8: #{tpu_custom_call.1} parent=0 // pred_region
    _
  $region9: #{tpu_custom_call.1} parent=0 // pred_fallthru
    _
  // Predicated region
  $region10: #{tpu_custom_call.1} parent=0 // pred_check
    _
  $region11: #{tpu_custom_call.1} parent=0 // pred_check_branch
    %3574 = sbr.rel (0) target = $region13
  $region12: #{tpu_custom_call.1} parent=0 // pred_region
    _
  $region13: #{tpu_custom_call.1} parent=0 // pred_fallthru
    _

</llo_original>
